<compile_context>
chip_gen: v7x
topology: tpu7x:2x2x1
jax: 0.10.0
libtpu: 0.0.40
codegen_flags: <defaults>
</compile_context>

<pallas_src>
import functools

import jax
import jax.numpy as jnp
from jax.experimental import pallas as pl
from jax.experimental.pallas import tpu as pltpu

EPS = 1e-5


def _round_up(n, m):
    return (n + m - 1) // m * m


def fnirsnet_kernel(x_ref, wd_ref, wfcb_ref, scal_ref, out_ref):
    """x_ref: (W, H, Bt)  batch-in-lanes input tile
       wd_ref: (C1, H, 1) depthwise weights (lane-broadcast columns)
       wfcb_ref: (OUT, C2+1) fc weight with bias packed as last column
       scal_ref: SMEM 1-D [w1f | b1f | wpf | bpf] (BN-folded scalars)
       out_ref: (OUT, Bt)"""
    W, H, Bt = x_ref.shape
    C1 = wd_ref.shape[0]
    OUT, c2p1 = wfcb_ref.shape
    C2 = c2p1 - 1

    W1_OFF = 0
    B1_OFF = W1_OFF + C1 * W
    WP_OFF = B1_OFF + C1
    BP_OFF = WP_OFF + C2 * C1

    # conv1 (+ folded BN1) + sigmoid, then depthwise reduction over H, per channel.
    # Per-channel structure keeps only one (H, Bt) accumulator live at a time.
    d = []                                                          # C1 x (1, Bt)
    for c1 in range(C1):
        acc = scal_ref[W1_OFF + c1 * W] * x_ref[0]
        for w in range(1, W):
            acc = acc + scal_ref[W1_OFF + c1 * W + w] * x_ref[w]
        y = jax.nn.sigmoid(acc + scal_ref[B1_OFF + c1])             # (H, Bt)
        d.append(jnp.sum(y * wd_ref[c1], axis=0, keepdims=True))    # (1, Bt)

    # pointwise 1x1 conv (+ depthwise bias + folded BN2) + sigmoid.
    z = []                                                          # C2 x (1, Bt)
    for c2 in range(C2):
        acc = scal_ref[WP_OFF + c2 * C1] * d[0]
        for c1 in range(1, C1):
            acc = acc + scal_ref[WP_OFF + c2 * C1 + c1] * d[c1]
        z.append(jax.nn.sigmoid(acc + scal_ref[BP_OFF + c2]))       # (1, Bt)

    # fc: out[o, b] = fc_b[o] + sum_c2 fc_w[o, c2] * z[c2][b]   (lane-dense VPU FMAs)
    acc = wfcb_ref[:, C2:C2 + 1]                                    # bias column (OUT, 1)
    for c2 in range(C2):
        acc = acc + wfcb_ref[:, c2:c2 + 1] * z[c2]                  # (OUT,1)*(1,Bt) -> (OUT,Bt)
    out_ref[...] = acc


@functools.partial(jax.jit, static_argnames=("b_tile",))
def fnirsnet_forward(x_nchw, P, b_tile=None):
    """x_nchw: (B, 1, 22, 10) float32. Returns (B, 50) float32."""
    B = x_nchw.shape[0]
    C1, _, _, W = P["conv1_w"].shape          # (4, 1, 1, 10)
    H = P["depth_w"].shape[2]                 # 22
    C2 = P["point_w"].shape[0]                # 8
    OUT = P["fc_w"].shape[0]                  # 50

    # ---- host-side parameter glue: fold BN, fuse biases, pack scalars --------
    s1 = P["bn1_g"] / jnp.sqrt(P["bn1_v"] + EPS)
    w1f = P["conv1_w"].reshape(C1, W) * s1[:, None]                       # (C1, W)
    b1f = (P["conv1_b"] - P["bn1_m"]) * s1 + P["bn1_b"]                   # (C1,)

    s2 = P["bn2_g"] / jnp.sqrt(P["bn2_v"] + EPS)
    wpf = P["point_w"].reshape(C2, C1) * s2[:, None]                      # (C2, C1)
    bpf = wpf @ P["depth_b"] + (P["point_b"] - P["bn2_m"]) * s2 + P["bn2_b"]  # (C2,)

    scal = jnp.concatenate(
        [w1f.reshape(-1), b1f, wpf.reshape(-1), bpf]).astype(jnp.float32)

    wd_col = P["depth_w"].reshape(C1, H)[:, :, None].astype(jnp.float32)  # (C1, H, 1)
    wfcb = jnp.concatenate(
        [P["fc_w"], P["fc_b"][:, None]], axis=1).astype(jnp.float32)      # (OUT, C2+1)

    # ---- batch-in-lanes input layout, batch padded to a tile multiple --------
    if b_tile is None:
        b_tile = min(512, _round_up(B, 128))
    B_pad = _round_up(B, b_tile)
    x_t = jnp.transpose(x_nchw.reshape(B, H, W), (2, 1, 0)).astype(jnp.float32)  # (W, H, B)
    if B_pad != B:
        x_t = jnp.pad(x_t, ((0, 0), (0, 0), (0, B_pad - B)))

    out_t = pl.pallas_call(
        fnirsnet_kernel,
        out_shape=jax.ShapeDtypeStruct((OUT, B_pad), jnp.float32),
        grid=(B_pad // b_tile,),
        in_specs=[
            pl.BlockSpec((W, H, b_tile), lambda i: (0, 0, i)),    # x tile (pipelined)
            pl.BlockSpec((C1, H, 1), lambda i: (0, 0, 0)),        # depthwise w (resident)
            pl.BlockSpec((OUT, C2 + 1), lambda i: (0, 0)),        # fc w+b     (resident)
            pl.BlockSpec(memory_space=pltpu.MemorySpace.SMEM),    # packed scalars
        ],
        out_specs=pl.BlockSpec((OUT, b_tile), lambda i: (0, i)),  # lane-dense output
        compiler_params=pltpu.CompilerParams(
            dimension_semantics=("parallel",)),
    )(x_t, wd_col, wfcb, scal)

    return out_t[:, :B].T                                          # (B, OUT)


# ---- pure-JAX reference (mirrors the PyTorch module exactly, inference BN) ----
def torch_like_reference(x_nchw, P):
    dn = ("NCHW", "OIHW", "NCHW")
    hi = jax.lax.Precision.HIGHEST

    def bn(y, g, b, m, v):
        g, b, m, v = (t[None, :, None, None] for t in (g, b, m, v))
        return (y - m) / jnp.sqrt(v + EPS) * g + b

    y = jax.lax.conv_general_dilated(x_nchw, P["conv1_w"], (1, 1), "VALID",
                                     dimension_numbers=dn, precision=hi)
    y = y + P["conv1_b"][None, :, None, None]
    y = jax.nn.sigmoid(bn(y, P["bn1_g"], P["bn1_b"], P["bn1_m"], P["bn1_v"]))
    z = jax.lax.conv_general_dilated(y, P["depth_w"], (1, 1), "VALID",
                                     dimension_numbers=dn,
                                     feature_group_count=P["depth_w"].shape[0],
                                     precision=hi)
    z = z + P["depth_b"][None, :, None, None]
    z = jax.lax.conv_general_dilated(z, P["point_w"], (1, 1), "VALID",
                                     dimension_numbers=dn, precision=hi)
    z = z + P["point_b"][None, :, None, None]
    z = jax.nn.sigmoid(bn(z, P["bn2_g"], P["bn2_b"], P["bn2_m"], P["bn2_v"]))
    z = z.reshape(z.shape[0], -1)
    return jnp.dot(z, P["fc_w"].T, precision=hi) + P["fc_b"]


if __name__ == "__main__":
    B = 2
    OUT, DHR_W, DW_H, C1, C2 = 50, 10, 22, 4, 8   # module defaults

    key = jax.random.PRNGKey(0)
    ks = jax.random.split(key, 20)

    def rn(k, shape, scale=0.2):
        return scale * jax.random.normal(k, shape, jnp.float32)

    P = {
        "conv1_w": rn(ks[1], (C1, 1, 1, DHR_W)),
        "conv1_b": rn(ks[2], (C1,)),
        "bn1_g":   1.0 + rn(ks[3], (C1,), 0.1),
        "bn1_b":   rn(ks[4], (C1,), 0.1),
        "bn1_m":   rn(ks[5], (C1,), 0.1),
        "bn1_v":   jax.random.uniform(ks[6], (C1,), jnp.float32, 0.5, 1.5),
        "depth_w": rn(ks[7], (C1, 1, DW_H, 1)),
        "depth_b": rn(ks[8], (C1,)),
        "point_w": rn(ks[9], (C2, C1, 1, 1)),
        "point_b": rn(ks[10], (C2,)),
        "bn2_g":   1.0 + rn(ks[11], (C2,), 0.1),
        "bn2_b":   rn(ks[12], (C2,), 0.1),
        "bn2_m":   rn(ks[13], (C2,), 0.1),
        "bn2_v":   jax.random.uniform(ks[14], (C2,), jnp.float32, 0.5, 1.5),
        "fc_w":    rn(ks[15], (OUT, C2)),
        "fc_b":    rn(ks[16], (OUT,)),
    }

    # Input shape fixed by the architecture: fc expects exactly num_DWConv features,
    # so the spatial dims must collapse to 1x1 -> x is (B, 1, 22, 10).
    x = jax.random.normal(ks[0], (B, 1, DW_H, DHR_W), jnp.float32)

    out = fnirsnet_forward(x, P)
    jax.block_until_ready(out)

    ref = torch_like_reference(x, P)
    assert out.shape == (B, OUT)
    assert jnp.allclose(out, ref, atol=2e-4, rtol=2e-4), "mismatch vs reference"

    print("KERNEL_OK")
</pallas_src>

<mosaic_0001>
module attributes {stable_mosaic.version = 11 : i64} {
  func.func @fnirsnet_kernel(%arg0: i32, %arg1: memref<10x22x128xf32, #tpu.memory_space<vmem>>, %arg2: memref<4x22x1xf32, #tpu.memory_space<vmem>>, %arg3: memref<50x9xf32, #tpu.memory_space<vmem>>, %arg4: memref<84xf32, #tpu.memory_space<smem>>, %arg5: memref<50x128xf32, #tpu.memory_space<vmem>>) attributes {dimension_semantics = [#tpu.dimension_semantics<parallel>], iteration_bounds = array<i64: 1>, scalar_prefetch = 0 : i64, scratch_operands = 0 : i64, tpu.core_type = #tpu.core_type<tc>, window_params = [{transform_indices = @transform_0, window_bounds = array<i64: 10, 22, 128>}, {pipeline_mode = #tpu.pipeline_mode<synchronous>, transform_indices = @transform_1, window_bounds = array<i64: 4, 22, 1>}, {pipeline_mode = #tpu.pipeline_mode<synchronous>, transform_indices = @transform_2, window_bounds = array<i64: 50, 9>}, {transform_indices = @transform_3, window_bounds = array<i64: 84>}, {transform_indices = @transform_4, window_bounds = array<i64: 50, 128>}]} {
    %c0 = arith.constant 0 : index
    %0 = memref.load %arg4[%c0] : memref<84xf32, #tpu.memory_space<smem>>
    %c0_0 = arith.constant 0 : index
    %c0_1 = arith.constant 0 : index
    %c0_2 = arith.constant 0 : index
    %1 = vector.load %arg1[%c0_0, %c0_1, %c0_2] : memref<10x22x128xf32, #tpu.memory_space<vmem>>, vector<1x22x128xf32>
    %2 = vector.shape_cast %1 : vector<1x22x128xf32> to vector<22x128xf32>
    %3 = vector.broadcast %0 : f32 to vector<22x128xf32>
    %4 = arith.mulf %3, %2 : vector<22x128xf32>
    %c1 = arith.constant 1 : index
    %5 = memref.load %arg4[%c1] : memref<84xf32, #tpu.memory_space<smem>>
    %c1_3 = arith.constant 1 : index
    %c0_4 = arith.constant 0 : index
    %c0_5 = arith.constant 0 : index
    %6 = vector.load %arg1[%c1_3, %c0_4, %c0_5] : memref<10x22x128xf32, #tpu.memory_space<vmem>>, vector<1x22x128xf32>
    %7 = vector.shape_cast %6 : vector<1x22x128xf32> to vector<22x128xf32>
    %8 = vector.broadcast %5 : f32 to vector<22x128xf32>
    %9 = arith.mulf %8, %7 : vector<22x128xf32>
    %10 = arith.addf %4, %9 : vector<22x128xf32>
    %c2 = arith.constant 2 : index
    %11 = memref.load %arg4[%c2] : memref<84xf32, #tpu.memory_space<smem>>
    %c2_6 = arith.constant 2 : index
    %c0_7 = arith.constant 0 : index
    %c0_8 = arith.constant 0 : index
    %12 = vector.load %arg1[%c2_6, %c0_7, %c0_8] : memref<10x22x128xf32, #tpu.memory_space<vmem>>, vector<1x22x128xf32>
    %13 = vector.shape_cast %12 : vector<1x22x128xf32> to vector<22x128xf32>
    %14 = vector.broadcast %11 : f32 to vector<22x128xf32>
    %15 = arith.mulf %14, %13 : vector<22x128xf32>
    %16 = arith.addf %10, %15 : vector<22x128xf32>
    %c3 = arith.constant 3 : index
    %17 = memref.load %arg4[%c3] : memref<84xf32, #tpu.memory_space<smem>>
    %c3_9 = arith.constant 3 : index
    %c0_10 = arith.constant 0 : index
    %c0_11 = arith.constant 0 : index
    %18 = vector.load %arg1[%c3_9, %c0_10, %c0_11] : memref<10x22x128xf32, #tpu.memory_space<vmem>>, vector<1x22x128xf32>
    %19 = vector.shape_cast %18 : vector<1x22x128xf32> to vector<22x128xf32>
    %20 = vector.broadcast %17 : f32 to vector<22x128xf32>
    %21 = arith.mulf %20, %19 : vector<22x128xf32>
    %22 = arith.addf %16, %21 : vector<22x128xf32>
    %c4 = arith.constant 4 : index
    %23 = memref.load %arg4[%c4] : memref<84xf32, #tpu.memory_space<smem>>
    %c4_12 = arith.constant 4 : index
    %c0_13 = arith.constant 0 : index
    %c0_14 = arith.constant 0 : index
    %24 = vector.load %arg1[%c4_12, %c0_13, %c0_14] : memref<10x22x128xf32, #tpu.memory_space<vmem>>, vector<1x22x128xf32>
    %25 = vector.shape_cast %24 : vector<1x22x128xf32> to vector<22x128xf32>
    %26 = vector.broadcast %23 : f32 to vector<22x128xf32>
    %27 = arith.mulf %26, %25 : vector<22x128xf32>
    %28 = arith.addf %22, %27 : vector<22x128xf32>
    %c5 = arith.constant 5 : index
    %29 = memref.load %arg4[%c5] : memref<84xf32, #tpu.memory_space<smem>>
    %c5_15 = arith.constant 5 : index
    %c0_16 = arith.constant 0 : index
    %c0_17 = arith.constant 0 : index
    %30 = vector.load %arg1[%c5_15, %c0_16, %c0_17] : memref<10x22x128xf32, #tpu.memory_space<vmem>>, vector<1x22x128xf32>
    %31 = vector.shape_cast %30 : vector<1x22x128xf32> to vector<22x128xf32>
    %32 = vector.broadcast %29 : f32 to vector<22x128xf32>
    %33 = arith.mulf %32, %31 : vector<22x128xf32>
    %34 = arith.addf %28, %33 : vector<22x128xf32>
    %c6 = arith.constant 6 : index
    %35 = memref.load %arg4[%c6] : memref<84xf32, #tpu.memory_space<smem>>
    %c6_18 = arith.constant 6 : index
    %c0_19 = arith.constant 0 : index
    %c0_20 = arith.constant 0 : index
    %36 = vector.load %arg1[%c6_18, %c0_19, %c0_20] : memref<10x22x128xf32, #tpu.memory_space<vmem>>, vector<1x22x128xf32>
    %37 = vector.shape_cast %36 : vector<1x22x128xf32> to vector<22x128xf32>
    %38 = vector.broadcast %35 : f32 to vector<22x128xf32>
    %39 = arith.mulf %38, %37 : vector<22x128xf32>
    %40 = arith.addf %34, %39 : vector<22x128xf32>
    %c7 = arith.constant 7 : index
    %41 = memref.load %arg4[%c7] : memref<84xf32, #tpu.memory_space<smem>>
    %c7_21 = arith.constant 7 : index
    %c0_22 = arith.constant 0 : index
    %c0_23 = arith.constant 0 : index
    %42 = vector.load %arg1[%c7_21, %c0_22, %c0_23] : memref<10x22x128xf32, #tpu.memory_space<vmem>>, vector<1x22x128xf32>
    %43 = vector.shape_cast %42 : vector<1x22x128xf32> to vector<22x128xf32>
    %44 = vector.broadcast %41 : f32 to vector<22x128xf32>
    %45 = arith.mulf %44, %43 : vector<22x128xf32>
    %46 = arith.addf %40, %45 : vector<22x128xf32>
    %c8 = arith.constant 8 : index
    %47 = memref.load %arg4[%c8] : memref<84xf32, #tpu.memory_space<smem>>
    %c8_24 = arith.constant 8 : index
    %c0_25 = arith.constant 0 : index
    %c0_26 = arith.constant 0 : index
    %48 = vector.load %arg1[%c8_24, %c0_25, %c0_26] : memref<10x22x128xf32, #tpu.memory_space<vmem>>, vector<1x22x128xf32>
    %49 = vector.shape_cast %48 : vector<1x22x128xf32> to vector<22x128xf32>
    %50 = vector.broadcast %47 : f32 to vector<22x128xf32>
    %51 = arith.mulf %50, %49 : vector<22x128xf32>
    %52 = arith.addf %46, %51 : vector<22x128xf32>
    %c9 = arith.constant 9 : index
    %53 = memref.load %arg4[%c9] : memref<84xf32, #tpu.memory_space<smem>>
    %c9_27 = arith.constant 9 : index
    %c0_28 = arith.constant 0 : index
    %c0_29 = arith.constant 0 : index
    %54 = vector.load %arg1[%c9_27, %c0_28, %c0_29] : memref<10x22x128xf32, #tpu.memory_space<vmem>>, vector<1x22x128xf32>
    %55 = vector.shape_cast %54 : vector<1x22x128xf32> to vector<22x128xf32>
    %56 = vector.broadcast %53 : f32 to vector<22x128xf32>
    %57 = arith.mulf %56, %55 : vector<22x128xf32>
    %58 = arith.addf %52, %57 : vector<22x128xf32>
    %c40 = arith.constant 40 : index
    %59 = memref.load %arg4[%c40] : memref<84xf32, #tpu.memory_space<smem>>
    %60 = vector.broadcast %59 : f32 to vector<22x128xf32>
    %61 = arith.addf %58, %60 : vector<22x128xf32>
    %62 = arith.negf %61 : vector<22x128xf32>
    %63 = math.exp %62 : vector<22x128xf32>
    %cst = arith.constant 1.000000e+00 : f32
    %64 = vector.broadcast %cst : f32 to vector<22x128xf32>
    %65 = arith.addf %64, %63 : vector<22x128xf32>
    %66 = arith.divf %64, %65 : vector<22x128xf32>
    %c0_30 = arith.constant 0 : index
    %c0_31 = arith.constant 0 : index
    %c0_32 = arith.constant 0 : index
    %67 = vector.load %arg2[%c0_30, %c0_31, %c0_32] : memref<4x22x1xf32, #tpu.memory_space<vmem>>, vector<1x22x1xf32>
    %68 = vector.shape_cast %67 : vector<1x22x1xf32> to vector<22x1xf32>
    %69 = vector.broadcast %68 : vector<22x1xf32> to vector<22x128xf32>
    %70 = arith.mulf %66, %69 : vector<22x128xf32>
    %cst_33 = arith.constant dense<0.000000e+00> : vector<128xf32>
    %71 = vector.multi_reduction <add>, %70, %cst_33 [0] : vector<22x128xf32> to vector<128xf32>
    %72 = vector.shape_cast %71 : vector<128xf32> to vector<1x128xf32>
    %c10 = arith.constant 10 : index
    %73 = memref.load %arg4[%c10] : memref<84xf32, #tpu.memory_space<smem>>
    %c0_34 = arith.constant 0 : index
    %c0_35 = arith.constant 0 : index
    %c0_36 = arith.constant 0 : index
    %74 = vector.load %arg1[%c0_34, %c0_35, %c0_36] : memref<10x22x128xf32, #tpu.memory_space<vmem>>, vector<1x22x128xf32>
    %75 = vector.shape_cast %74 : vector<1x22x128xf32> to vector<22x128xf32>
    %76 = vector.broadcast %73 : f32 to vector<22x128xf32>
    %77 = arith.mulf %76, %75 : vector<22x128xf32>
    %c11 = arith.constant 11 : index
    %78 = memref.load %arg4[%c11] : memref<84xf32, #tpu.memory_space<smem>>
    %c1_37 = arith.constant 1 : index
    %c0_38 = arith.constant 0 : index
    %c0_39 = arith.constant 0 : index
    %79 = vector.load %arg1[%c1_37, %c0_38, %c0_39] : memref<10x22x128xf32, #tpu.memory_space<vmem>>, vector<1x22x128xf32>
    %80 = vector.shape_cast %79 : vector<1x22x128xf32> to vector<22x128xf32>
    %81 = vector.broadcast %78 : f32 to vector<22x128xf32>
    %82 = arith.mulf %81, %80 : vector<22x128xf32>
    %83 = arith.addf %77, %82 : vector<22x128xf32>
    %c12 = arith.constant 12 : index
    %84 = memref.load %arg4[%c12] : memref<84xf32, #tpu.memory_space<smem>>
    %c2_40 = arith.constant 2 : index
    %c0_41 = arith.constant 0 : index
    %c0_42 = arith.constant 0 : index
    %85 = vector.load %arg1[%c2_40, %c0_41, %c0_42] : memref<10x22x128xf32, #tpu.memory_space<vmem>>, vector<1x22x128xf32>
    %86 = vector.shape_cast %85 : vector<1x22x128xf32> to vector<22x128xf32>
    %87 = vector.broadcast %84 : f32 to vector<22x128xf32>
    %88 = arith.mulf %87, %86 : vector<22x128xf32>
    %89 = arith.addf %83, %88 : vector<22x128xf32>
    %c13 = arith.constant 13 : index
    %90 = memref.load %arg4[%c13] : memref<84xf32, #tpu.memory_space<smem>>
    %c3_43 = arith.constant 3 : index
    %c0_44 = arith.constant 0 : index
    %c0_45 = arith.constant 0 : index
    %91 = vector.load %arg1[%c3_43, %c0_44, %c0_45] : memref<10x22x128xf32, #tpu.memory_space<vmem>>, vector<1x22x128xf32>
    %92 = vector.shape_cast %91 : vector<1x22x128xf32> to vector<22x128xf32>
    %93 = vector.broadcast %90 : f32 to vector<22x128xf32>
    %94 = arith.mulf %93, %92 : vector<22x128xf32>
    %95 = arith.addf %89, %94 : vector<22x128xf32>
    %c14 = arith.constant 14 : index
    %96 = memref.load %arg4[%c14] : memref<84xf32, #tpu.memory_space<smem>>
    %c4_46 = arith.constant 4 : index
    %c0_47 = arith.constant 0 : index
    %c0_48 = arith.constant 0 : index
    %97 = vector.load %arg1[%c4_46, %c0_47, %c0_48] : memref<10x22x128xf32, #tpu.memory_space<vmem>>, vector<1x22x128xf32>
    %98 = vector.shape_cast %97 : vector<1x22x128xf32> to vector<22x128xf32>
    %99 = vector.broadcast %96 : f32 to vector<22x128xf32>
    %100 = arith.mulf %99, %98 : vector<22x128xf32>
    %101 = arith.addf %95, %100 : vector<22x128xf32>
    %c15 = arith.constant 15 : index
    %102 = memref.load %arg4[%c15] : memref<84xf32, #tpu.memory_space<smem>>
    %c5_49 = arith.constant 5 : index
    %c0_50 = arith.constant 0 : index
    %c0_51 = arith.constant 0 : index
    %103 = vector.load %arg1[%c5_49, %c0_50, %c0_51] : memref<10x22x128xf32, #tpu.memory_space<vmem>>, vector<1x22x128xf32>
    %104 = vector.shape_cast %103 : vector<1x22x128xf32> to vector<22x128xf32>
    %105 = vector.broadcast %102 : f32 to vector<22x128xf32>
    %106 = arith.mulf %105, %104 : vector<22x128xf32>
    %107 = arith.addf %101, %106 : vector<22x128xf32>
    %c16 = arith.constant 16 : index
    %108 = memref.load %arg4[%c16] : memref<84xf32, #tpu.memory_space<smem>>
    %c6_52 = arith.constant 6 : index
    %c0_53 = arith.constant 0 : index
    %c0_54 = arith.constant 0 : index
    %109 = vector.load %arg1[%c6_52, %c0_53, %c0_54] : memref<10x22x128xf32, #tpu.memory_space<vmem>>, vector<1x22x128xf32>
    %110 = vector.shape_cast %109 : vector<1x22x128xf32> to vector<22x128xf32>
    %111 = vector.broadcast %108 : f32 to vector<22x128xf32>
    %112 = arith.mulf %111, %110 : vector<22x128xf32>
    %113 = arith.addf %107, %112 : vector<22x128xf32>
    %c17 = arith.constant 17 : index
    %114 = memref.load %arg4[%c17] : memref<84xf32, #tpu.memory_space<smem>>
    %c7_55 = arith.constant 7 : index
    %c0_56 = arith.constant 0 : index
    %c0_57 = arith.constant 0 : index
    %115 = vector.load %arg1[%c7_55, %c0_56, %c0_57] : memref<10x22x128xf32, #tpu.memory_space<vmem>>, vector<1x22x128xf32>
    %116 = vector.shape_cast %115 : vector<1x22x128xf32> to vector<22x128xf32>
    %117 = vector.broadcast %114 : f32 to vector<22x128xf32>
    %118 = arith.mulf %117, %116 : vector<22x128xf32>
    %119 = arith.addf %113, %118 : vector<22x128xf32>
    %c18 = arith.constant 18 : index
    %120 = memref.load %arg4[%c18] : memref<84xf32, #tpu.memory_space<smem>>
    %c8_58 = arith.constant 8 : index
    %c0_59 = arith.constant 0 : index
    %c0_60 = arith.constant 0 : index
    %121 = vector.load %arg1[%c8_58, %c0_59, %c0_60] : memref<10x22x128xf32, #tpu.memory_space<vmem>>, vector<1x22x128xf32>
    %122 = vector.shape_cast %121 : vector<1x22x128xf32> to vector<22x128xf32>
    %123 = vector.broadcast %120 : f32 to vector<22x128xf32>
    %124 = arith.mulf %123, %122 : vector<22x128xf32>
    %125 = arith.addf %119, %124 : vector<22x128xf32>
    %c19 = arith.constant 19 : index
    %126 = memref.load %arg4[%c19] : memref<84xf32, #tpu.memory_space<smem>>
    %c9_61 = arith.constant 9 : index
    %c0_62 = arith.constant 0 : index
    %c0_63 = arith.constant 0 : index
    %127 = vector.load %arg1[%c9_61, %c0_62, %c0_63] : memref<10x22x128xf32, #tpu.memory_space<vmem>>, vector<1x22x128xf32>
    %128 = vector.shape_cast %127 : vector<1x22x128xf32> to vector<22x128xf32>
    %129 = vector.broadcast %126 : f32 to vector<22x128xf32>
    %130 = arith.mulf %129, %128 : vector<22x128xf32>
    %131 = arith.addf %125, %130 : vector<22x128xf32>
    %c41 = arith.constant 41 : index
    %132 = memref.load %arg4[%c41] : memref<84xf32, #tpu.memory_space<smem>>
    %133 = vector.broadcast %132 : f32 to vector<22x128xf32>
    %134 = arith.addf %131, %133 : vector<22x128xf32>
    %135 = arith.negf %134 : vector<22x128xf32>
    %136 = math.exp %135 : vector<22x128xf32>
    %cst_64 = arith.constant 1.000000e+00 : f32
    %137 = vector.broadcast %cst_64 : f32 to vector<22x128xf32>
    %138 = arith.addf %137, %136 : vector<22x128xf32>
    %139 = arith.divf %137, %138 : vector<22x128xf32>
    %c1_65 = arith.constant 1 : index
    %c0_66 = arith.constant 0 : index
    %c0_67 = arith.constant 0 : index
    %140 = vector.load %arg2[%c1_65, %c0_66, %c0_67] : memref<4x22x1xf32, #tpu.memory_space<vmem>>, vector<1x22x1xf32>
    %141 = vector.shape_cast %140 : vector<1x22x1xf32> to vector<22x1xf32>
    %142 = vector.broadcast %141 : vector<22x1xf32> to vector<22x128xf32>
    %143 = arith.mulf %139, %142 : vector<22x128xf32>
    %cst_68 = arith.constant dense<0.000000e+00> : vector<128xf32>
    %144 = vector.multi_reduction <add>, %143, %cst_68 [0] : vector<22x128xf32> to vector<128xf32>
    %145 = vector.shape_cast %144 : vector<128xf32> to vector<1x128xf32>
    %c20 = arith.constant 20 : index
    %146 = memref.load %arg4[%c20] : memref<84xf32, #tpu.memory_space<smem>>
    %c0_69 = arith.constant 0 : index
    %c0_70 = arith.constant 0 : index
    %c0_71 = arith.constant 0 : index
    %147 = vector.load %arg1[%c0_69, %c0_70, %c0_71] : memref<10x22x128xf32, #tpu.memory_space<vmem>>, vector<1x22x128xf32>
    %148 = vector.shape_cast %147 : vector<1x22x128xf32> to vector<22x128xf32>
    %149 = vector.broadcast %146 : f32 to vector<22x128xf32>
    %150 = arith.mulf %149, %148 : vector<22x128xf32>
    %c21 = arith.constant 21 : index
    %151 = memref.load %arg4[%c21] : memref<84xf32, #tpu.memory_space<smem>>
    %c1_72 = arith.constant 1 : index
    %c0_73 = arith.constant 0 : index
    %c0_74 = arith.constant 0 : index
    %152 = vector.load %arg1[%c1_72, %c0_73, %c0_74] : memref<10x22x128xf32, #tpu.memory_space<vmem>>, vector<1x22x128xf32>
    %153 = vector.shape_cast %152 : vector<1x22x128xf32> to vector<22x128xf32>
    %154 = vector.broadcast %151 : f32 to vector<22x128xf32>
    %155 = arith.mulf %154, %153 : vector<22x128xf32>
    %156 = arith.addf %150, %155 : vector<22x128xf32>
    %c22 = arith.constant 22 : index
    %157 = memref.load %arg4[%c22] : memref<84xf32, #tpu.memory_space<smem>>
    %c2_75 = arith.constant 2 : index
    %c0_76 = arith.constant 0 : index
    %c0_77 = arith.constant 0 : index
    %158 = vector.load %arg1[%c2_75, %c0_76, %c0_77] : memref<10x22x128xf32, #tpu.memory_space<vmem>>, vector<1x22x128xf32>
    %159 = vector.shape_cast %158 : vector<1x22x128xf32> to vector<22x128xf32>
    %160 = vector.broadcast %157 : f32 to vector<22x128xf32>
    %161 = arith.mulf %160, %159 : vector<22x128xf32>
    %162 = arith.addf %156, %161 : vector<22x128xf32>
    %c23 = arith.constant 23 : index
    %163 = memref.load %arg4[%c23] : memref<84xf32, #tpu.memory_space<smem>>
    %c3_78 = arith.constant 3 : index
    %c0_79 = arith.constant 0 : index
    %c0_80 = arith.constant 0 : index
    %164 = vector.load %arg1[%c3_78, %c0_79, %c0_80] : memref<10x22x128xf32, #tpu.memory_space<vmem>>, vector<1x22x128xf32>
    %165 = vector.shape_cast %164 : vector<1x22x128xf32> to vector<22x128xf32>
    %166 = vector.broadcast %163 : f32 to vector<22x128xf32>
    %167 = arith.mulf %166, %165 : vector<22x128xf32>
    %168 = arith.addf %162, %167 : vector<22x128xf32>
    %c24 = arith.constant 24 : index
    %169 = memref.load %arg4[%c24] : memref<84xf32, #tpu.memory_space<smem>>
    %c4_81 = arith.constant 4 : index
    %c0_82 = arith.constant 0 : index
    %c0_83 = arith.constant 0 : index
    %170 = vector.load %arg1[%c4_81, %c0_82, %c0_83] : memref<10x22x128xf32, #tpu.memory_space<vmem>>, vector<1x22x128xf32>
    %171 = vector.shape_cast %170 : vector<1x22x128xf32> to vector<22x128xf32>
    %172 = vector.broadcast %169 : f32 to vector<22x128xf32>
    %173 = arith.mulf %172, %171 : vector<22x128xf32>
    %174 = arith.addf %168, %173 : vector<22x128xf32>
    %c25 = arith.constant 25 : index
    %175 = memref.load %arg4[%c25] : memref<84xf32, #tpu.memory_space<smem>>
    %c5_84 = arith.constant 5 : index
    %c0_85 = arith.constant 0 : index
    %c0_86 = arith.constant 0 : index
    %176 = vector.load %arg1[%c5_84, %c0_85, %c0_86] : memref<10x22x128xf32, #tpu.memory_space<vmem>>, vector<1x22x128xf32>
    %177 = vector.shape_cast %176 : vector<1x22x128xf32> to vector<22x128xf32>
    %178 = vector.broadcast %175 : f32 to vector<22x128xf32>
    %179 = arith.mulf %178, %177 : vector<22x128xf32>
    %180 = arith.addf %174, %179 : vector<22x128xf32>
    %c26 = arith.constant 26 : index
    %181 = memref.load %arg4[%c26] : memref<84xf32, #tpu.memory_space<smem>>
    %c6_87 = arith.constant 6 : index
    %c0_88 = arith.constant 0 : index
    %c0_89 = arith.constant 0 : index
    %182 = vector.load %arg1[%c6_87, %c0_88, %c0_89] : memref<10x22x128xf32, #tpu.memory_space<vmem>>, vector<1x22x128xf32>
    %183 = vector.shape_cast %182 : vector<1x22x128xf32> to vector<22x128xf32>
    %184 = vector.broadcast %181 : f32 to vector<22x128xf32>
    %185 = arith.mulf %184, %183 : vector<22x128xf32>
    %186 = arith.addf %180, %185 : vector<22x128xf32>
    %c27 = arith.constant 27 : index
    %187 = memref.load %arg4[%c27] : memref<84xf32, #tpu.memory_space<smem>>
    %c7_90 = arith.constant 7 : index
    %c0_91 = arith.constant 0 : index
    %c0_92 = arith.constant 0 : index
    %188 = vector.load %arg1[%c7_90, %c0_91, %c0_92] : memref<10x22x128xf32, #tpu.memory_space<vmem>>, vector<1x22x128xf32>
    %189 = vector.shape_cast %188 : vector<1x22x128xf32> to vector<22x128xf32>
    %190 = vector.broadcast %187 : f32 to vector<22x128xf32>
    %191 = arith.mulf %190, %189 : vector<22x128xf32>
    %192 = arith.addf %186, %191 : vector<22x128xf32>
    %c28 = arith.constant 28 : index
    %193 = memref.load %arg4[%c28] : memref<84xf32, #tpu.memory_space<smem>>
    %c8_93 = arith.constant 8 : index
    %c0_94 = arith.constant 0 : index
    %c0_95 = arith.constant 0 : index
    %194 = vector.load %arg1[%c8_93, %c0_94, %c0_95] : memref<10x22x128xf32, #tpu.memory_space<vmem>>, vector<1x22x128xf32>
    %195 = vector.shape_cast %194 : vector<1x22x128xf32> to vector<22x128xf32>
    %196 = vector.broadcast %193 : f32 to vector<22x128xf32>
    %197 = arith.mulf %196, %195 : vector<22x128xf32>
    %198 = arith.addf %192, %197 : vector<22x128xf32>
    %c29 = arith.constant 29 : index
    %199 = memref.load %arg4[%c29] : memref<84xf32, #tpu.memory_space<smem>>
    %c9_96 = arith.constant 9 : index
    %c0_97 = arith.constant 0 : index
    %c0_98 = arith.constant 0 : index
    %200 = vector.load %arg1[%c9_96, %c0_97, %c0_98] : memref<10x22x128xf32, #tpu.memory_space<vmem>>, vector<1x22x128xf32>
    %201 = vector.shape_cast %200 : vector<1x22x128xf32> to vector<22x128xf32>
    %202 = vector.broadcast %199 : f32 to vector<22x128xf32>
    %203 = arith.mulf %202, %201 : vector<22x128xf32>
    %204 = arith.addf %198, %203 : vector<22x128xf32>
    %c42 = arith.constant 42 : index
    %205 = memref.load %arg4[%c42] : memref<84xf32, #tpu.memory_space<smem>>
    %206 = vector.broadcast %205 : f32 to vector<22x128xf32>
    %207 = arith.addf %204, %206 : vector<22x128xf32>
    %208 = arith.negf %207 : vector<22x128xf32>
    %209 = math.exp %208 : vector<22x128xf32>
    %cst_99 = arith.constant 1.000000e+00 : f32
    %210 = vector.broadcast %cst_99 : f32 to vector<22x128xf32>
    %211 = arith.addf %210, %209 : vector<22x128xf32>
    %212 = arith.divf %210, %211 : vector<22x128xf32>
    %c2_100 = arith.constant 2 : index
    %c0_101 = arith.constant 0 : index
    %c0_102 = arith.constant 0 : index
    %213 = vector.load %arg2[%c2_100, %c0_101, %c0_102] : memref<4x22x1xf32, #tpu.memory_space<vmem>>, vector<1x22x1xf32>
    %214 = vector.shape_cast %213 : vector<1x22x1xf32> to vector<22x1xf32>
    %215 = vector.broadcast %214 : vector<22x1xf32> to vector<22x128xf32>
    %216 = arith.mulf %212, %215 : vector<22x128xf32>
    %cst_103 = arith.constant dense<0.000000e+00> : vector<128xf32>
    %217 = vector.multi_reduction <add>, %216, %cst_103 [0] : vector<22x128xf32> to vector<128xf32>
    %218 = vector.shape_cast %217 : vector<128xf32> to vector<1x128xf32>
    %c30 = arith.constant 30 : index
    %219 = memref.load %arg4[%c30] : memref<84xf32, #tpu.memory_space<smem>>
    %c0_104 = arith.constant 0 : index
    %c0_105 = arith.constant 0 : index
    %c0_106 = arith.constant 0 : index
    %220 = vector.load %arg1[%c0_104, %c0_105, %c0_106] : memref<10x22x128xf32, #tpu.memory_space<vmem>>, vector<1x22x128xf32>
    %221 = vector.shape_cast %220 : vector<1x22x128xf32> to vector<22x128xf32>
    %222 = vector.broadcast %219 : f32 to vector<22x128xf32>
    %223 = arith.mulf %222, %221 : vector<22x128xf32>
    %c31 = arith.constant 31 : index
    %224 = memref.load %arg4[%c31] : memref<84xf32, #tpu.memory_space<smem>>
    %c1_107 = arith.constant 1 : index
    %c0_108 = arith.constant 0 : index
    %c0_109 = arith.constant 0 : index
    %225 = vector.load %arg1[%c1_107, %c0_108, %c0_109] : memref<10x22x128xf32, #tpu.memory_space<vmem>>, vector<1x22x128xf32>
    %226 = vector.shape_cast %225 : vector<1x22x128xf32> to vector<22x128xf32>
    %227 = vector.broadcast %224 : f32 to vector<22x128xf32>
    %228 = arith.mulf %227, %226 : vector<22x128xf32>
    %229 = arith.addf %223, %228 : vector<22x128xf32>
    %c32 = arith.constant 32 : index
    %230 = memref.load %arg4[%c32] : memref<84xf32, #tpu.memory_space<smem>>
    %c2_110 = arith.constant 2 : index
    %c0_111 = arith.constant 0 : index
    %c0_112 = arith.constant 0 : index
    %231 = vector.load %arg1[%c2_110, %c0_111, %c0_112] : memref<10x22x128xf32, #tpu.memory_space<vmem>>, vector<1x22x128xf32>
    %232 = vector.shape_cast %231 : vector<1x22x128xf32> to vector<22x128xf32>
    %233 = vector.broadcast %230 : f32 to vector<22x128xf32>
    %234 = arith.mulf %233, %232 : vector<22x128xf32>
    %235 = arith.addf %229, %234 : vector<22x128xf32>
    %c33 = arith.constant 33 : index
    %236 = memref.load %arg4[%c33] : memref<84xf32, #tpu.memory_space<smem>>
    %c3_113 = arith.constant 3 : index
    %c0_114 = arith.constant 0 : index
    %c0_115 = arith.constant 0 : index
    %237 = vector.load %arg1[%c3_113, %c0_114, %c0_115] : memref<10x22x128xf32, #tpu.memory_space<vmem>>, vector<1x22x128xf32>
    %238 = vector.shape_cast %237 : vector<1x22x128xf32> to vector<22x128xf32>
    %239 = vector.broadcast %236 : f32 to vector<22x128xf32>
    %240 = arith.mulf %239, %238 : vector<22x128xf32>
    %241 = arith.addf %235, %240 : vector<22x128xf32>
    %c34 = arith.constant 34 : index
    %242 = memref.load %arg4[%c34] : memref<84xf32, #tpu.memory_space<smem>>
    %c4_116 = arith.constant 4 : index
    %c0_117 = arith.constant 0 : index
    %c0_118 = arith.constant 0 : index
    %243 = vector.load %arg1[%c4_116, %c0_117, %c0_118] : memref<10x22x128xf32, #tpu.memory_space<vmem>>, vector<1x22x128xf32>
    %244 = vector.shape_cast %243 : vector<1x22x128xf32> to vector<22x128xf32>
    %245 = vector.broadcast %242 : f32 to vector<22x128xf32>
    %246 = arith.mulf %245, %244 : vector<22x128xf32>
    %247 = arith.addf %241, %246 : vector<22x128xf32>
    %c35 = arith.constant 35 : index
    %248 = memref.load %arg4[%c35] : memref<84xf32, #tpu.memory_space<smem>>
    %c5_119 = arith.constant 5 : index
    %c0_120 = arith.constant 0 : index
    %c0_121 = arith.constant 0 : index
    %249 = vector.load %arg1[%c5_119, %c0_120, %c0_121] : memref<10x22x128xf32, #tpu.memory_space<vmem>>, vector<1x22x128xf32>
    %250 = vector.shape_cast %249 : vector<1x22x128xf32> to vector<22x128xf32>
    %251 = vector.broadcast %248 : f32 to vector<22x128xf32>
    %252 = arith.mulf %251, %250 : vector<22x128xf32>
    %253 = arith.addf %247, %252 : vector<22x128xf32>
    %c36 = arith.constant 36 : index
    %254 = memref.load %arg4[%c36] : memref<84xf32, #tpu.memory_space<smem>>
    %c6_122 = arith.constant 6 : index
    %c0_123 = arith.constant 0 : index
    %c0_124 = arith.constant 0 : index
    %255 = vector.load %arg1[%c6_122, %c0_123, %c0_124] : memref<10x22x128xf32, #tpu.memory_space<vmem>>, vector<1x22x128xf32>
    %256 = vector.shape_cast %255 : vector<1x22x128xf32> to vector<22x128xf32>
    %257 = vector.broadcast %254 : f32 to vector<22x128xf32>
    %258 = arith.mulf %257, %256 : vector<22x128xf32>
    %259 = arith.addf %253, %258 : vector<22x128xf32>
    %c37 = arith.constant 37 : index
    %260 = memref.load %arg4[%c37] : memref<84xf32, #tpu.memory_space<smem>>
    %c7_125 = arith.constant 7 : index
    %c0_126 = arith.constant 0 : index
    %c0_127 = arith.constant 0 : index
    %261 = vector.load %arg1[%c7_125, %c0_126, %c0_127] : memref<10x22x128xf32, #tpu.memory_space<vmem>>, vector<1x22x128xf32>
    %262 = vector.shape_cast %261 : vector<1x22x128xf32> to vector<22x128xf32>
    %263 = vector.broadcast %260 : f32 to vector<22x128xf32>
    %264 = arith.mulf %263, %262 : vector<22x128xf32>
    %265 = arith.addf %259, %264 : vector<22x128xf32>
    %c38 = arith.constant 38 : index
    %266 = memref.load %arg4[%c38] : memref<84xf32, #tpu.memory_space<smem>>
    %c8_128 = arith.constant 8 : index
    %c0_129 = arith.constant 0 : index
    %c0_130 = arith.constant 0 : index
    %267 = vector.load %arg1[%c8_128, %c0_129, %c0_130] : memref<10x22x128xf32, #tpu.memory_space<vmem>>, vector<1x22x128xf32>
    %268 = vector.shape_cast %267 : vector<1x22x128xf32> to vector<22x128xf32>
    %269 = vector.broadcast %266 : f32 to vector<22x128xf32>
    %270 = arith.mulf %269, %268 : vector<22x128xf32>
    %271 = arith.addf %265, %270 : vector<22x128xf32>
    %c39 = arith.constant 39 : index
    %272 = memref.load %arg4[%c39] : memref<84xf32, #tpu.memory_space<smem>>
    %c9_131 = arith.constant 9 : index
    %c0_132 = arith.constant 0 : index
    %c0_133 = arith.constant 0 : index
    %273 = vector.load %arg1[%c9_131, %c0_132, %c0_133] : memref<10x22x128xf32, #tpu.memory_space<vmem>>, vector<1x22x128xf32>
    %274 = vector.shape_cast %273 : vector<1x22x128xf32> to vector<22x128xf32>
    %275 = vector.broadcast %272 : f32 to vector<22x128xf32>
    %276 = arith.mulf %275, %274 : vector<22x128xf32>
    %277 = arith.addf %271, %276 : vector<22x128xf32>
    %c43 = arith.constant 43 : index
    %278 = memref.load %arg4[%c43] : memref<84xf32, #tpu.memory_space<smem>>
    %279 = vector.broadcast %278 : f32 to vector<22x128xf32>
    %280 = arith.addf %277, %279 : vector<22x128xf32>
    %281 = arith.negf %280 : vector<22x128xf32>
    %282 = math.exp %281 : vector<22x128xf32>
    %cst_134 = arith.constant 1.000000e+00 : f32
    %283 = vector.broadcast %cst_134 : f32 to vector<22x128xf32>
    %284 = arith.addf %283, %282 : vector<22x128xf32>
    %285 = arith.divf %283, %284 : vector<22x128xf32>
    %c3_135 = arith.constant 3 : index
    %c0_136 = arith.constant 0 : index
    %c0_137 = arith.constant 0 : index
    %286 = vector.load %arg2[%c3_135, %c0_136, %c0_137] : memref<4x22x1xf32, #tpu.memory_space<vmem>>, vector<1x22x1xf32>
    %287 = vector.shape_cast %286 : vector<1x22x1xf32> to vector<22x1xf32>
    %288 = vector.broadcast %287 : vector<22x1xf32> to vector<22x128xf32>
    %289 = arith.mulf %285, %288 : vector<22x128xf32>
    %cst_138 = arith.constant dense<0.000000e+00> : vector<128xf32>
    %290 = vector.multi_reduction <add>, %289, %cst_138 [0] : vector<22x128xf32> to vector<128xf32>
    %291 = vector.shape_cast %290 : vector<128xf32> to vector<1x128xf32>
    %c44 = arith.constant 44 : index
    %292 = memref.load %arg4[%c44] : memref<84xf32, #tpu.memory_space<smem>>
    %293 = vector.broadcast %292 : f32 to vector<1x128xf32>
    %294 = arith.mulf %293, %72 : vector<1x128xf32>
    %c45 = arith.constant 45 : index
    %295 = memref.load %arg4[%c45] : memref<84xf32, #tpu.memory_space<smem>>
    %296 = vector.broadcast %295 : f32 to vector<1x128xf32>
    %297 = arith.mulf %296, %145 : vector<1x128xf32>
    %298 = arith.addf %294, %297 : vector<1x128xf32>
    %c46 = arith.constant 46 : index
    %299 = memref.load %arg4[%c46] : memref<84xf32, #tpu.memory_space<smem>>
    %300 = vector.broadcast %299 : f32 to vector<1x128xf32>
    %301 = arith.mulf %300, %218 : vector<1x128xf32>
    %302 = arith.addf %298, %301 : vector<1x128xf32>
    %c47 = arith.constant 47 : index
    %303 = memref.load %arg4[%c47] : memref<84xf32, #tpu.memory_space<smem>>
    %304 = vector.broadcast %303 : f32 to vector<1x128xf32>
    %305 = arith.mulf %304, %291 : vector<1x128xf32>
    %306 = arith.addf %302, %305 : vector<1x128xf32>
    %c76 = arith.constant 76 : index
    %307 = memref.load %arg4[%c76] : memref<84xf32, #tpu.memory_space<smem>>
    %308 = vector.broadcast %307 : f32 to vector<1x128xf32>
    %309 = arith.addf %306, %308 : vector<1x128xf32>
    %310 = arith.negf %309 : vector<1x128xf32>
    %311 = math.exp %310 : vector<1x128xf32>
    %cst_139 = arith.constant 1.000000e+00 : f32
    %312 = vector.broadcast %cst_139 : f32 to vector<1x128xf32>
    %313 = arith.addf %312, %311 : vector<1x128xf32>
    %314 = arith.divf %312, %313 : vector<1x128xf32>
    %c48 = arith.constant 48 : index
    %315 = memref.load %arg4[%c48] : memref<84xf32, #tpu.memory_space<smem>>
    %316 = vector.broadcast %315 : f32 to vector<1x128xf32>
    %317 = arith.mulf %316, %72 : vector<1x128xf32>
    %c49 = arith.constant 49 : index
    %318 = memref.load %arg4[%c49] : memref<84xf32, #tpu.memory_space<smem>>
    %319 = vector.broadcast %318 : f32 to vector<1x128xf32>
    %320 = arith.mulf %319, %145 : vector<1x128xf32>
    %321 = arith.addf %317, %320 : vector<1x128xf32>
    %c50 = arith.constant 50 : index
    %322 = memref.load %arg4[%c50] : memref<84xf32, #tpu.memory_space<smem>>
    %323 = vector.broadcast %322 : f32 to vector<1x128xf32>
    %324 = arith.mulf %323, %218 : vector<1x128xf32>
    %325 = arith.addf %321, %324 : vector<1x128xf32>
    %c51 = arith.constant 51 : index
    %326 = memref.load %arg4[%c51] : memref<84xf32, #tpu.memory_space<smem>>
    %327 = vector.broadcast %326 : f32 to vector<1x128xf32>
    %328 = arith.mulf %327, %291 : vector<1x128xf32>
    %329 = arith.addf %325, %328 : vector<1x128xf32>
    %c77 = arith.constant 77 : index
    %330 = memref.load %arg4[%c77] : memref<84xf32, #tpu.memory_space<smem>>
    %331 = vector.broadcast %330 : f32 to vector<1x128xf32>
    %332 = arith.addf %329, %331 : vector<1x128xf32>
    %333 = arith.negf %332 : vector<1x128xf32>
    %334 = math.exp %333 : vector<1x128xf32>
    %cst_140 = arith.constant 1.000000e+00 : f32
    %335 = vector.broadcast %cst_140 : f32 to vector<1x128xf32>
    %336 = arith.addf %335, %334 : vector<1x128xf32>
    %337 = arith.divf %335, %336 : vector<1x128xf32>
    %c52 = arith.constant 52 : index
    %338 = memref.load %arg4[%c52] : memref<84xf32, #tpu.memory_space<smem>>
    %339 = vector.broadcast %338 : f32 to vector<1x128xf32>
    %340 = arith.mulf %339, %72 : vector<1x128xf32>
    %c53 = arith.constant 53 : index
    %341 = memref.load %arg4[%c53] : memref<84xf32, #tpu.memory_space<smem>>
    %342 = vector.broadcast %341 : f32 to vector<1x128xf32>
    %343 = arith.mulf %342, %145 : vector<1x128xf32>
    %344 = arith.addf %340, %343 : vector<1x128xf32>
    %c54 = arith.constant 54 : index
    %345 = memref.load %arg4[%c54] : memref<84xf32, #tpu.memory_space<smem>>
    %346 = vector.broadcast %345 : f32 to vector<1x128xf32>
    %347 = arith.mulf %346, %218 : vector<1x128xf32>
    %348 = arith.addf %344, %347 : vector<1x128xf32>
    %c55 = arith.constant 55 : index
    %349 = memref.load %arg4[%c55] : memref<84xf32, #tpu.memory_space<smem>>
    %350 = vector.broadcast %349 : f32 to vector<1x128xf32>
    %351 = arith.mulf %350, %291 : vector<1x128xf32>
    %352 = arith.addf %348, %351 : vector<1x128xf32>
    %c78 = arith.constant 78 : index
    %353 = memref.load %arg4[%c78] : memref<84xf32, #tpu.memory_space<smem>>
    %354 = vector.broadcast %353 : f32 to vector<1x128xf32>
    %355 = arith.addf %352, %354 : vector<1x128xf32>
    %356 = arith.negf %355 : vector<1x128xf32>
    %357 = math.exp %356 : vector<1x128xf32>
    %cst_141 = arith.constant 1.000000e+00 : f32
    %358 = vector.broadcast %cst_141 : f32 to vector<1x128xf32>
    %359 = arith.addf %358, %357 : vector<1x128xf32>
    %360 = arith.divf %358, %359 : vector<1x128xf32>
    %c56 = arith.constant 56 : index
    %361 = memref.load %arg4[%c56] : memref<84xf32, #tpu.memory_space<smem>>
    %362 = vector.broadcast %361 : f32 to vector<1x128xf32>
    %363 = arith.mulf %362, %72 : vector<1x128xf32>
    %c57 = arith.constant 57 : index
    %364 = memref.load %arg4[%c57] : memref<84xf32, #tpu.memory_space<smem>>
    %365 = vector.broadcast %364 : f32 to vector<1x128xf32>
    %366 = arith.mulf %365, %145 : vector<1x128xf32>
    %367 = arith.addf %363, %366 : vector<1x128xf32>
    %c58 = arith.constant 58 : index
    %368 = memref.load %arg4[%c58] : memref<84xf32, #tpu.memory_space<smem>>
    %369 = vector.broadcast %368 : f32 to vector<1x128xf32>
    %370 = arith.mulf %369, %218 : vector<1x128xf32>
    %371 = arith.addf %367, %370 : vector<1x128xf32>
    %c59 = arith.constant 59 : index
    %372 = memref.load %arg4[%c59] : memref<84xf32, #tpu.memory_space<smem>>
    %373 = vector.broadcast %372 : f32 to vector<1x128xf32>
    %374 = arith.mulf %373, %291 : vector<1x128xf32>
    %375 = arith.addf %371, %374 : vector<1x128xf32>
    %c79 = arith.constant 79 : index
    %376 = memref.load %arg4[%c79] : memref<84xf32, #tpu.memory_space<smem>>
    %377 = vector.broadcast %376 : f32 to vector<1x128xf32>
    %378 = arith.addf %375, %377 : vector<1x128xf32>
    %379 = arith.negf %378 : vector<1x128xf32>
    %380 = math.exp %379 : vector<1x128xf32>
    %cst_142 = arith.constant 1.000000e+00 : f32
    %381 = vector.broadcast %cst_142 : f32 to vector<1x128xf32>
    %382 = arith.addf %381, %380 : vector<1x128xf32>
    %383 = arith.divf %381, %382 : vector<1x128xf32>
    %c60 = arith.constant 60 : index
    %384 = memref.load %arg4[%c60] : memref<84xf32, #tpu.memory_space<smem>>
    %385 = vector.broadcast %384 : f32 to vector<1x128xf32>
    %386 = arith.mulf %385, %72 : vector<1x128xf32>
    %c61 = arith.constant 61 : index
    %387 = memref.load %arg4[%c61] : memref<84xf32, #tpu.memory_space<smem>>
    %388 = vector.broadcast %387 : f32 to vector<1x128xf32>
    %389 = arith.mulf %388, %145 : vector<1x128xf32>
    %390 = arith.addf %386, %389 : vector<1x128xf32>
    %c62 = arith.constant 62 : index
    %391 = memref.load %arg4[%c62] : memref<84xf32, #tpu.memory_space<smem>>
    %392 = vector.broadcast %391 : f32 to vector<1x128xf32>
    %393 = arith.mulf %392, %218 : vector<1x128xf32>
    %394 = arith.addf %390, %393 : vector<1x128xf32>
    %c63 = arith.constant 63 : index
    %395 = memref.load %arg4[%c63] : memref<84xf32, #tpu.memory_space<smem>>
    %396 = vector.broadcast %395 : f32 to vector<1x128xf32>
    %397 = arith.mulf %396, %291 : vector<1x128xf32>
    %398 = arith.addf %394, %397 : vector<1x128xf32>
    %c80 = arith.constant 80 : index
    %399 = memref.load %arg4[%c80] : memref<84xf32, #tpu.memory_space<smem>>
    %400 = vector.broadcast %399 : f32 to vector<1x128xf32>
    %401 = arith.addf %398, %400 : vector<1x128xf32>
    %402 = arith.negf %401 : vector<1x128xf32>
    %403 = math.exp %402 : vector<1x128xf32>
    %cst_143 = arith.constant 1.000000e+00 : f32
    %404 = vector.broadcast %cst_143 : f32 to vector<1x128xf32>
    %405 = arith.addf %404, %403 : vector<1x128xf32>
    %406 = arith.divf %404, %405 : vector<1x128xf32>
    %c64 = arith.constant 64 : index
    %407 = memref.load %arg4[%c64] : memref<84xf32, #tpu.memory_space<smem>>
    %408 = vector.broadcast %407 : f32 to vector<1x128xf32>
    %409 = arith.mulf %408, %72 : vector<1x128xf32>
    %c65 = arith.constant 65 : index
    %410 = memref.load %arg4[%c65] : memref<84xf32, #tpu.memory_space<smem>>
    %411 = vector.broadcast %410 : f32 to vector<1x128xf32>
    %412 = arith.mulf %411, %145 : vector<1x128xf32>
    %413 = arith.addf %409, %412 : vector<1x128xf32>
    %c66 = arith.constant 66 : index
    %414 = memref.load %arg4[%c66] : memref<84xf32, #tpu.memory_space<smem>>
    %415 = vector.broadcast %414 : f32 to vector<1x128xf32>
    %416 = arith.mulf %415, %218 : vector<1x128xf32>
    %417 = arith.addf %413, %416 : vector<1x128xf32>
    %c67 = arith.constant 67 : index
    %418 = memref.load %arg4[%c67] : memref<84xf32, #tpu.memory_space<smem>>
    %419 = vector.broadcast %418 : f32 to vector<1x128xf32>
    %420 = arith.mulf %419, %291 : vector<1x128xf32>
    %421 = arith.addf %417, %420 : vector<1x128xf32>
    %c81 = arith.constant 81 : index
    %422 = memref.load %arg4[%c81] : memref<84xf32, #tpu.memory_space<smem>>
    %423 = vector.broadcast %422 : f32 to vector<1x128xf32>
    %424 = arith.addf %421, %423 : vector<1x128xf32>
    %425 = arith.negf %424 : vector<1x128xf32>
    %426 = math.exp %425 : vector<1x128xf32>
    %cst_144 = arith.constant 1.000000e+00 : f32
    %427 = vector.broadcast %cst_144 : f32 to vector<1x128xf32>
    %428 = arith.addf %427, %426 : vector<1x128xf32>
    %429 = arith.divf %427, %428 : vector<1x128xf32>
    %c68 = arith.constant 68 : index
    %430 = memref.load %arg4[%c68] : memref<84xf32, #tpu.memory_space<smem>>
    %431 = vector.broadcast %430 : f32 to vector<1x128xf32>
    %432 = arith.mulf %431, %72 : vector<1x128xf32>
    %c69 = arith.constant 69 : index
    %433 = memref.load %arg4[%c69] : memref<84xf32, #tpu.memory_space<smem>>
    %434 = vector.broadcast %433 : f32 to vector<1x128xf32>
    %435 = arith.mulf %434, %145 : vector<1x128xf32>
    %436 = arith.addf %432, %435 : vector<1x128xf32>
    %c70 = arith.constant 70 : index
    %437 = memref.load %arg4[%c70] : memref<84xf32, #tpu.memory_space<smem>>
    %438 = vector.broadcast %437 : f32 to vector<1x128xf32>
    %439 = arith.mulf %438, %218 : vector<1x128xf32>
    %440 = arith.addf %436, %439 : vector<1x128xf32>
    %c71 = arith.constant 71 : index
    %441 = memref.load %arg4[%c71] : memref<84xf32, #tpu.memory_space<smem>>
    %442 = vector.broadcast %441 : f32 to vector<1x128xf32>
    %443 = arith.mulf %442, %291 : vector<1x128xf32>
    %444 = arith.addf %440, %443 : vector<1x128xf32>
    %c82 = arith.constant 82 : index
    %445 = memref.load %arg4[%c82] : memref<84xf32, #tpu.memory_space<smem>>
    %446 = vector.broadcast %445 : f32 to vector<1x128xf32>
    %447 = arith.addf %444, %446 : vector<1x128xf32>
    %448 = arith.negf %447 : vector<1x128xf32>
    %449 = math.exp %448 : vector<1x128xf32>
    %cst_145 = arith.constant 1.000000e+00 : f32
    %450 = vector.broadcast %cst_145 : f32 to vector<1x128xf32>
    %451 = arith.addf %450, %449 : vector<1x128xf32>
    %452 = arith.divf %450, %451 : vector<1x128xf32>
    %c72 = arith.constant 72 : index
    %453 = memref.load %arg4[%c72] : memref<84xf32, #tpu.memory_space<smem>>
    %454 = vector.broadcast %453 : f32 to vector<1x128xf32>
    %455 = arith.mulf %454, %72 : vector<1x128xf32>
    %c73 = arith.constant 73 : index
    %456 = memref.load %arg4[%c73] : memref<84xf32, #tpu.memory_space<smem>>
    %457 = vector.broadcast %456 : f32 to vector<1x128xf32>
    %458 = arith.mulf %457, %145 : vector<1x128xf32>
    %459 = arith.addf %455, %458 : vector<1x128xf32>
    %c74 = arith.constant 74 : index
    %460 = memref.load %arg4[%c74] : memref<84xf32, #tpu.memory_space<smem>>
    %461 = vector.broadcast %460 : f32 to vector<1x128xf32>
    %462 = arith.mulf %461, %218 : vector<1x128xf32>
    %463 = arith.addf %459, %462 : vector<1x128xf32>
    %c75 = arith.constant 75 : index
    %464 = memref.load %arg4[%c75] : memref<84xf32, #tpu.memory_space<smem>>
    %465 = vector.broadcast %464 : f32 to vector<1x128xf32>
    %466 = arith.mulf %465, %291 : vector<1x128xf32>
    %467 = arith.addf %463, %466 : vector<1x128xf32>
    %c83 = arith.constant 83 : index
    %468 = memref.load %arg4[%c83] : memref<84xf32, #tpu.memory_space<smem>>
    %469 = vector.broadcast %468 : f32 to vector<1x128xf32>
    %470 = arith.addf %467, %469 : vector<1x128xf32>
    %471 = arith.negf %470 : vector<1x128xf32>
    %472 = math.exp %471 : vector<1x128xf32>
    %cst_146 = arith.constant 1.000000e+00 : f32
    %473 = vector.broadcast %cst_146 : f32 to vector<1x128xf32>
    %474 = arith.addf %473, %472 : vector<1x128xf32>
    %475 = arith.divf %473, %474 : vector<1x128xf32>
    %c0_147 = arith.constant 0 : index
    %c8_148 = arith.constant 8 : index
    %476 = vector.load %arg3[%c0_147, %c8_148] : memref<50x9xf32, #tpu.memory_space<vmem>>, vector<50x1xf32>
    %c0_149 = arith.constant 0 : index
    %c0_150 = arith.constant 0 : index
    %477 = vector.load %arg3[%c0_149, %c0_150] : memref<50x9xf32, #tpu.memory_space<vmem>>, vector<50x1xf32>
    %478 = vector.broadcast %477 : vector<50x1xf32> to vector<50x128xf32>
    %479 = vector.broadcast %314 : vector<1x128xf32> to vector<50x128xf32>
    %480 = arith.mulf %478, %479 : vector<50x128xf32>
    %481 = vector.broadcast %476 : vector<50x1xf32> to vector<50x128xf32>
    %482 = arith.addf %481, %480 : vector<50x128xf32>
    %c0_151 = arith.constant 0 : index
    %c1_152 = arith.constant 1 : index
    %483 = vector.load %arg3[%c0_151, %c1_152] : memref<50x9xf32, #tpu.memory_space<vmem>>, vector<50x1xf32>
    %484 = vector.broadcast %483 : vector<50x1xf32> to vector<50x128xf32>
    %485 = vector.broadcast %337 : vector<1x128xf32> to vector<50x128xf32>
    %486 = arith.mulf %484, %485 : vector<50x128xf32>
    %487 = arith.addf %482, %486 : vector<50x128xf32>
    %c0_153 = arith.constant 0 : index
    %c2_154 = arith.constant 2 : index
    %488 = vector.load %arg3[%c0_153, %c2_154] : memref<50x9xf32, #tpu.memory_space<vmem>>, vector<50x1xf32>
    %489 = vector.broadcast %488 : vector<50x1xf32> to vector<50x128xf32>
    %490 = vector.broadcast %360 : vector<1x128xf32> to vector<50x128xf32>
    %491 = arith.mulf %489, %490 : vector<50x128xf32>
    %492 = arith.addf %487, %491 : vector<50x128xf32>
    %c0_155 = arith.constant 0 : index
    %c3_156 = arith.constant 3 : index
    %493 = vector.load %arg3[%c0_155, %c3_156] : memref<50x9xf32, #tpu.memory_space<vmem>>, vector<50x1xf32>
    %494 = vector.broadcast %493 : vector<50x1xf32> to vector<50x128xf32>
    %495 = vector.broadcast %383 : vector<1x128xf32> to vector<50x128xf32>
    %496 = arith.mulf %494, %495 : vector<50x128xf32>
    %497 = arith.addf %492, %496 : vector<50x128xf32>
    %c0_157 = arith.constant 0 : index
    %c4_158 = arith.constant 4 : index
    %498 = vector.load %arg3[%c0_157, %c4_158] : memref<50x9xf32, #tpu.memory_space<vmem>>, vector<50x1xf32>
    %499 = vector.broadcast %498 : vector<50x1xf32> to vector<50x128xf32>
    %500 = vector.broadcast %406 : vector<1x128xf32> to vector<50x128xf32>
    %501 = arith.mulf %499, %500 : vector<50x128xf32>
    %502 = arith.addf %497, %501 : vector<50x128xf32>
    %c0_159 = arith.constant 0 : index
    %c5_160 = arith.constant 5 : index
    %503 = vector.load %arg3[%c0_159, %c5_160] : memref<50x9xf32, #tpu.memory_space<vmem>>, vector<50x1xf32>
    %504 = vector.broadcast %503 : vector<50x1xf32> to vector<50x128xf32>
    %505 = vector.broadcast %429 : vector<1x128xf32> to vector<50x128xf32>
    %506 = arith.mulf %504, %505 : vector<50x128xf32>
    %507 = arith.addf %502, %506 : vector<50x128xf32>
    %c0_161 = arith.constant 0 : index
    %c6_162 = arith.constant 6 : index
    %508 = vector.load %arg3[%c0_161, %c6_162] : memref<50x9xf32, #tpu.memory_space<vmem>>, vector<50x1xf32>
    %509 = vector.broadcast %508 : vector<50x1xf32> to vector<50x128xf32>
    %510 = vector.broadcast %452 : vector<1x128xf32> to vector<50x128xf32>
    %511 = arith.mulf %509, %510 : vector<50x128xf32>
    %512 = arith.addf %507, %511 : vector<50x128xf32>
    %c0_163 = arith.constant 0 : index
    %c7_164 = arith.constant 7 : index
    %513 = vector.load %arg3[%c0_163, %c7_164] : memref<50x9xf32, #tpu.memory_space<vmem>>, vector<50x1xf32>
    %514 = vector.broadcast %513 : vector<50x1xf32> to vector<50x128xf32>
    %515 = vector.broadcast %475 : vector<1x128xf32> to vector<50x128xf32>
    %516 = arith.mulf %514, %515 : vector<50x128xf32>
    %517 = arith.addf %512, %516 : vector<50x128xf32>
    %c0_165 = arith.constant 0 : index
    %c0_166 = arith.constant 0 : index
    %518 = vector.load %arg5[%c0_165, %c0_166] : memref<50x128xf32, #tpu.memory_space<vmem>>, vector<50x128xf32>
    tpu.vector_store %arg5[%c0_165, %c0_166], %517 {strides = array<i32>} : memref<50x128xf32, #tpu.memory_space<vmem>>, vector<50x128xf32>,
    return
  }
  func.func @transform_0(%arg0: i32) -> (i32, i32, i32) {
    %c0_i32 = arith.constant 0 : i32
    %c0_i32_0 = arith.constant 0 : i32
    %c0_i32_1 = arith.constant 0 : i32
    return %c0_i32, %c0_i32_0, %arg0 : i32, i32, i32
  }
  func.func @transform_1(%arg0: i32) -> (i32, i32, i32) {
    %c0_i32 = arith.constant 0 : i32
    %c0_i32_0 = arith.constant 0 : i32
    %c0_i32_1 = arith.constant 0 : i32
    %c0_i32_2 = arith.constant 0 : i32
    return %c0_i32, %c0_i32_0, %c0_i32_1 : i32, i32, i32
  }
  func.func @transform_2(%arg0: i32) -> (i32, i32) {
    %c0_i32 = arith.constant 0 : i32
    %c0_i32_0 = arith.constant 0 : i32
    %c0_i32_1 = arith.constant 0 : i32
    return %c0_i32, %c0_i32_0 : i32, i32
  }
  func.func @transform_3(%arg0: i32) -> i32 {
    %c0_i32 = arith.constant 0 : i32
    %c0_i32_0 = arith.constant 0 : i32
    return %c0_i32 : i32
  }
  func.func @transform_4(%arg0: i32) -> (i32, i32) {
    %c0_i32 = arith.constant 0 : i32
    %c0_i32_0 = arith.constant 0 : i32
    return %c0_i32, %arg0 : i32, i32
  }
}

</mosaic_0001>

<llo_original>
// kernel: mul.1
$region0: #{mul.1}
  #allocation0 [shape = 's32[1]{0}', space=sflag, size = 0x4, scoped, tag = 'scoped memory for mul.1']
  %s0 = inlined_call_operand.vmem [shape: f32[32], index: 0, kind: input, shape index: {}]
  %s1 = inlined_call_operand.vmem [shape: f32[32], index: 1, kind: input, shape index: {}]
  %s2 = inlined_call_operand.vmem [shape: f32[32], index: 2, kind: output, shape index: {}]
  %v3 = vld [vmem:[%s0] sm:$0x1]
  %v4 = vld [vmem:[%s1] sm:$0x1]
  %5 = xla_tuple %v3, %v4
  %6 = xla_tuple %5
  %v7 = vmul.f32 %v3, %v4
  %8 = xla_tuple %v7
  %9 = vst [vmem:[%s2] sm:$0x1] %v7

// kernel: mul.0
$region0: #{mul.0}
  #allocation0 [shape = 's32[1]{0}', space=sflag, size = 0x4, scoped, tag = 'scoped memory for mul.0']
  %s0 = inlined_call_operand.vmem [shape: f32[40], index: 0, kind: input, shape index: {}]
  %s1 = inlined_call_operand.vmem [shape: f32[40], index: 1, kind: input, shape index: {}]
  %s2 = inlined_call_operand.vmem [shape: f32[40], index: 2, kind: output, shape index: {}]
  %v3 = vld [vmem:[%s0] sm:$0x1]
  %v4 = vld [vmem:[%s1] sm:$0x1]
  %5 = xla_tuple %v3, %v4
  %6 = xla_tuple %5
  %v7 = vmul.f32 %v3, %v4
  %8 = xla_tuple %v7
  %9 = vst [vmem:[%s2] sm:$0x1] %v7

// kernel: fnirsnet_forward.1
$region0: #{fnirsnet_forward.1}
  #allocation0 [shape = 'u32[]', space=smem, size = 0x4, offset = 0x4, fixed_abs, tag = 'smem constant byte address 0x4 - core index']
  #allocation1 [shape = 'u32[144,128]{1,0:T(1,128)}', space=vmem, size = 0x12000, scoped, tag = 'internal scratch']
  %s0 = inlined_call_operand.vmem [shape: f32[10,22,128], index: 0, kind: input, shape index: {}]
  %s1 = inlined_call_operand.vmem [shape: f32[4,22,1], index: 1, kind: input, shape index: {}]
  %s2 = inlined_call_operand.vmem [shape: f32[50,9], index: 2, kind: input, shape index: {}]
  %s3 = inlined_call_operand.vmem [shape: f32[84], index: 3, kind: input, shape index: {}]
  %s4 = inlined_call_operand.vmem [shape: f32[50,128], index: 4, kind: output, shape index: {}]
  %s5 = sld [smem:[#allocation0]]
  $region30: #{fnirsnet_forward.1} parent=0
    _
  %s7 = ssub.s32 1, %s5
  %s8 = scalar_select 0, %s7, %s5
  $region1: #{fnirsnet_forward.1} parent=0
    #allocation2 [shape = 'u8[512]{0}', space=smem, size = 0x200, scoped, tag = 'input window, operand 3, single buffered']
    #allocation3 [shape = 's32[1]{0}', space=sflag, size = 0x4, scoped, tag = 'scoped memory for fnirsnet_forward.1']
    %9 = vsyncpa [#allocation3], 0
    // Predicated region
    $region2: #{fnirsnet_forward.1} parent=1 // pred_check
      _
    $region3: #{fnirsnet_forward.1} parent=1 // pred_check_branch
      %11 = sbr.rel (0) target = $region5
    $region4: #{fnirsnet_forward.1} parent=1 // pred_region
      _
    $region5: #{fnirsnet_forward.1} parent=1 // pred_fallthru
      _
    // Predicated region
    $region6: #{fnirsnet_forward.1} parent=1 // pred_check
      _
    $region7: #{fnirsnet_forward.1} parent=1 // pred_check_branch
      %13 = sbr.rel (0) target = $region9
    $region8: #{fnirsnet_forward.1} parent=1 // pred_region
      _
    $region9: #{fnirsnet_forward.1} parent=1 // pred_fallthru
      _
    // Predicated region
    $region10: #{fnirsnet_forward.1} parent=1 // pred_check
      _
    $region11: #{fnirsnet_forward.1} parent=1 // pred_check_branch
      %15 = sbr.rel (0) target = $region13
    $region12: #{fnirsnet_forward.1} parent=1 // pred_region
      _
    $region13: #{fnirsnet_forward.1} parent=1 // pred_fallthru
      _
    // Predicated region
    $region14: #{fnirsnet_forward.1} parent=1 // pred_check
      _
    $region15: #{fnirsnet_forward.1} parent=1 // pred_check_branch
      %17 = sbr.rel (0) target = $region17
    $region16: #{fnirsnet_forward.1} parent=1 // pred_region
      %s19 = ssub.s32 16, 16
      %20 = vsyncadd [#allocation3], %s19
      %s22 = sshll.u32 %s3, 4
      %s23 = int_to_ptr.vmem [resolvable:$true] %s22
      %25 = dma.vmem_to_smem %s23, 16, [#allocation2], [#allocation3]
    $region17: #{fnirsnet_forward.1} parent=1 // pred_fallthru
      _
    // Predicated region
    $region18: #{fnirsnet_forward.1} parent=1 // pred_check
      _
    $region19: #{fnirsnet_forward.1} parent=1 // pred_check_branch
      %27 = sbr.rel (0) target = $region21
    $region20: #{fnirsnet_forward.1} parent=1 // pred_region
      %28 = dma.done [#allocation3], 16
    $region21: #{fnirsnet_forward.1} parent=1 // pred_fallthru
      _
    %29 = sfence
    %s30 = sld [smem:[#allocation2]]
    %v31 = vld [vmem:[%s0] sm:$0xff]
    %v32 = vld [vmem:[%s0 + $0x8] sm:$0xff]
    %v33 = vld [vmem:[%s0 + $0x10] sm:$0x3f]
    %v34 = vstv %s30
    %v35 = vmul.f32 %v34, %v31
    %v36 = vmul.f32 %v34, %v32
    %v37 = vmul.f32 %v34, %v33
    %s38 = sld [smem:[#allocation2 + $0x1]]
    %s39 = scalar_lea.vmem %s0, 24
    %v40 = vld [vmem:[%s39] sm:$0xff]
    %v41 = vld [vmem:[%s39 + $0x8] sm:$0xff]
    %v42 = vld [vmem:[%s39 + $0x10] sm:$0x3f]
    %v43 = vstv %s38
    %v44 = vmul.f32 %v43, %v40
    %v45 = vmul.f32 %v43, %v41
    %v46 = vmul.f32 %v43, %v42
    %v47 = vadd.f32 %v35, %v44
    %v48 = vadd.f32 %v36, %v45
    %v49 = vadd.f32 %v37, %v46
    %s50 = sld [smem:[#allocation2 + $0x2]]
    %s51 = scalar_lea.vmem %s0, 48
    %v52 = vld [vmem:[%s51] sm:$0xff]
    %v53 = vld [vmem:[%s51 + $0x8] sm:$0xff]
    %v54 = vld [vmem:[%s51 + $0x10] sm:$0x3f]
    %v55 = vstv %s50
    %v56 = vmul.f32 %v55, %v52
    %v57 = vmul.f32 %v55, %v53
    %v58 = vmul.f32 %v55, %v54
    %v59 = vadd.f32 %v47, %v56
    %v60 = vadd.f32 %v48, %v57
    %v61 = vadd.f32 %v49, %v58
    %s62 = sld [smem:[#allocation2 + $0x3]]
    %s63 = scalar_lea.vmem %s0, 72
    %v64 = vld [vmem:[%s63] sm:$0xff]
    %v65 = vld [vmem:[%s63 + $0x8] sm:$0xff]
    %v66 = vld [vmem:[%s63 + $0x10] sm:$0x3f]
    %v67 = vstv %s62
    %v68 = vmul.f32 %v67, %v64
    %v69 = vmul.f32 %v67, %v65
    %v70 = vmul.f32 %v67, %v66
    %v71 = vadd.f32 %v59, %v68
    %v72 = vadd.f32 %v60, %v69
    %v73 = vadd.f32 %v61, %v70
    %s74 = sld [smem:[#allocation2 + $0x4]]
    %s75 = scalar_lea.vmem %s0, 96
    %v76 = vld [vmem:[%s75] sm:$0xff]
    %v77 = vld [vmem:[%s75 + $0x8] sm:$0xff]
    %v78 = vld [vmem:[%s75 + $0x10] sm:$0x3f]
    %v79 = vstv %s74
    %v80 = vmul.f32 %v79, %v76
    %v81 = vmul.f32 %v79, %v77
    %v82 = vmul.f32 %v79, %v78
    %v83 = vadd.f32 %v71, %v80
    %v84 = vadd.f32 %v72, %v81
    %v85 = vadd.f32 %v73, %v82
    %s86 = sld [smem:[#allocation2 + $0x5]]
    %s87 = scalar_lea.vmem %s0, 120
    %v88 = vld [vmem:[%s87] sm:$0xff]
    %v89 = vld [vmem:[%s87 + $0x8] sm:$0xff]
    %v90 = vld [vmem:[%s87 + $0x10] sm:$0x3f]
    %v91 = vstv %s86
    %v92 = vmul.f32 %v91, %v88
    %v93 = vmul.f32 %v91, %v89
    %v94 = vmul.f32 %v91, %v90
    %v95 = vadd.f32 %v83, %v92
    %v96 = vadd.f32 %v84, %v93
    %v97 = vadd.f32 %v85, %v94
    %s98 = sld [smem:[#allocation2 + $0x6]]
    %s99 = scalar_lea.vmem %s0, 144
    %v100 = vld [vmem:[%s99] sm:$0xff]
    %v101 = vld [vmem:[%s99 + $0x8] sm:$0xff]
    %v102 = vld [vmem:[%s99 + $0x10] sm:$0x3f]
    %v103 = vstv %s98
    %v104 = vmul.f32 %v103, %v100
    %v105 = vmul.f32 %v103, %v101
    %v106 = vmul.f32 %v103, %v102
    %v107 = vadd.f32 %v95, %v104
    %v108 = vadd.f32 %v96, %v105
    %v109 = vadd.f32 %v97, %v106
    %s110 = sld [smem:[#allocation2 + $0x7]]
    %s111 = scalar_lea.vmem %s0, 168
    %v112 = vld [vmem:[%s111] sm:$0xff]
    %v113 = vld [vmem:[%s111 + $0x8] sm:$0xff]
    %v114 = vld [vmem:[%s111 + $0x10] sm:$0x3f]
    %v115 = vstv %s110
    %v116 = vmul.f32 %v115, %v112
    %v117 = vmul.f32 %v115, %v113
    %v118 = vmul.f32 %v115, %v114
    %v119 = vadd.f32 %v107, %v116
    %v120 = vadd.f32 %v108, %v117
    %v121 = vadd.f32 %v109, %v118
    %s122 = sld [smem:[#allocation2 + $0x8]]
    %s123 = scalar_lea.vmem %s0, 192
    %v124 = vld [vmem:[%s123] sm:$0xff]
    %v125 = vld [vmem:[%s123 + $0x8] sm:$0xff]
    %v126 = vld [vmem:[%s123 + $0x10] sm:$0x3f]
    %v127 = vstv %s122
    %v128 = vmul.f32 %v127, %v124
    %v129 = vmul.f32 %v127, %v125
    %v130 = vmul.f32 %v127, %v126
    %v131 = vadd.f32 %v119, %v128
    %v132 = vadd.f32 %v120, %v129
    %v133 = vadd.f32 %v121, %v130
    %s134 = sld [smem:[#allocation2 + $0x9]]
    %s135 = scalar_lea.vmem %s0, 216
    %v136 = vld [vmem:[%s135] sm:$0xff]
    %v137 = vld [vmem:[%s135 + $0x8] sm:$0xff]
    %v138 = vld [vmem:[%s135 + $0x10] sm:$0x3f]
    %v139 = vstv %s134
    %v140 = vmul.f32 %v139, %v136
    %v141 = vmul.f32 %v139, %v137
    %v142 = vmul.f32 %v139, %v138
    %v143 = vadd.f32 %v131, %v140
    %v144 = vadd.f32 %v132, %v141
    %v145 = vadd.f32 %v133, %v142
    %s146 = sld [smem:[#allocation2 + $0x28]]
    %v147 = vstv %s146
    %v148 = vadd.f32 %v143, %v147
    %v149 = vadd.f32 %v144, %v147
    %v150 = vadd.f32 %v145, %v147
    %v151 = vxor.u32 %v148, 2147483648
    %v152 = vxor.u32 %v149, 2147483648
    %v153 = vxor.u32 %v150, 2147483648
    %v154 = vmul.f32 %v151, 1.442695
    %v155 = vpow.pop %v154
    %v156 = vmul.f32 %v152, 1.442695
    %v157 = vpow.pop %v156
    %v158 = vmul.f32 %v153, 1.442695
    %v159 = vpow.pop %v158
    %v160 = vadd.f32 %v155, 1.0
    %v161 = vadd.f32 %v157, 1.0
    %v162 = vadd.f32 %v159, 1.0
    %v163 = vrcp.pop %v160
    %v164 = vmul.f32 1.0, %v163
    %v165 = vrcp.pop %v161
    %v166 = vmul.f32 1.0, %v165
    %v167 = vrcp.pop %v162
    %v168 = vmul.f32 1.0, %v167
    %v169 = vld [vmem:[%s1] sm:$0xff]
    %v170 = vld [vmem:[%s1 + $0x8] sm:$0xff]
    %v171 = vld [vmem:[%s1 + $0x10] sm:$0x3f]
    %173 = vset.pattern.permute.xlu0 0
    %174 = vperm.xlu0 %173, %v169
    %v175 = vpop.permute.xlu0 %174
    %178 = vset.pattern.permute.xlu0 0
    %179 = vperm.xlu0 %178, %v170
    %v180 = vpop.permute.xlu0 %179
    %183 = vset.pattern.permute.xlu0 0
    %184 = vperm.xlu0 %183, %v171
    %v185 = vpop.permute.xlu0 %184
    %v187 = vmul.f32 %v164, %v175
    %v188 = vmul.f32 %v166, %v180
    %v189 = vmul.f32 %v168, %v185
    %v190 = vadd.f32 %v187, %v188
    %vm191 = vcmask 1045504
    %v192 = vsel %vm191, %v189, 0.0
    %v193 = vadd.f32 %v190, %v192
    %v194 = vrot.slane %v193, 4
    %v195 = vadd.f32 %v193, %v194
    %v196 = vrot.slane %v195, 2
    %v197 = vadd.f32 %v195, %v196
    %v198 = vrot.slane %v197, 1
    %v199 = vadd.f32 %v197, %v198
    %s200 = sld [smem:[#allocation2 + $0xa]]
    %v201 = vstv %s200
    %v202 = vmul.f32 %v201, %v31
    %v203 = vmul.f32 %v201, %v32
    %v204 = vmul.f32 %v201, %v33
    %s205 = sld [smem:[#allocation2 + $0xb]]
    %v206 = vstv %s205
    %v207 = vmul.f32 %v206, %v40
    %v208 = vmul.f32 %v206, %v41
    %v209 = vmul.f32 %v206, %v42
    %v210 = vadd.f32 %v202, %v207
    %v211 = vadd.f32 %v203, %v208
    %v212 = vadd.f32 %v204, %v209
    %s213 = sld [smem:[#allocation2 + $0xc]]
    %v214 = vstv %s213
    %v215 = vmul.f32 %v214, %v52
    %v216 = vmul.f32 %v214, %v53
    %v217 = vmul.f32 %v214, %v54
    %v218 = vadd.f32 %v210, %v215
    %v219 = vadd.f32 %v211, %v216
    %v220 = vadd.f32 %v212, %v217
    %s221 = sld [smem:[#allocation2 + $0xd]]
    %v222 = vstv %s221
    %v223 = vmul.f32 %v222, %v64
    %v224 = vmul.f32 %v222, %v65
    %v225 = vmul.f32 %v222, %v66
    %v226 = vadd.f32 %v218, %v223
    %v227 = vadd.f32 %v219, %v224
    %v228 = vadd.f32 %v220, %v225
    %s229 = sld [smem:[#allocation2 + $0xe]]
    %v230 = vstv %s229
    %v231 = vmul.f32 %v230, %v76
    %v232 = vmul.f32 %v230, %v77
    %v233 = vmul.f32 %v230, %v78
    %v234 = vadd.f32 %v226, %v231
    %v235 = vadd.f32 %v227, %v232
    %v236 = vadd.f32 %v228, %v233
    %s237 = sld [smem:[#allocation2 + $0xf]]
    %v238 = vstv %s237
    %v239 = vmul.f32 %v238, %v88
    %v240 = vmul.f32 %v238, %v89
    %v241 = vmul.f32 %v238, %v90
    %v242 = vadd.f32 %v234, %v239
    %v243 = vadd.f32 %v235, %v240
    %v244 = vadd.f32 %v236, %v241
    %s245 = sld [smem:[#allocation2 + $0x10]]
    %v246 = vstv %s245
    %v247 = vmul.f32 %v246, %v100
    %v248 = vmul.f32 %v246, %v101
    %v249 = vmul.f32 %v246, %v102
    %v250 = vadd.f32 %v242, %v247
    %v251 = vadd.f32 %v243, %v248
    %v252 = vadd.f32 %v244, %v249
    %s253 = sld [smem:[#allocation2 + $0x11]]
    %v254 = vstv %s253
    %v255 = vmul.f32 %v254, %v112
    %v256 = vmul.f32 %v254, %v113
    %v257 = vmul.f32 %v254, %v114
    %v258 = vadd.f32 %v250, %v255
    %v259 = vadd.f32 %v251, %v256
    %v260 = vadd.f32 %v252, %v257
    %s261 = sld [smem:[#allocation2 + $0x12]]
    %v262 = vstv %s261
    %v263 = vmul.f32 %v262, %v124
    %v264 = vmul.f32 %v262, %v125
    %v265 = vmul.f32 %v262, %v126
    %v266 = vadd.f32 %v258, %v263
    %v267 = vadd.f32 %v259, %v264
    %v268 = vadd.f32 %v260, %v265
    %s269 = sld [smem:[#allocation2 + $0x13]]
    %v270 = vstv %s269
    %v271 = vmul.f32 %v270, %v136
    %v272 = vmul.f32 %v270, %v137
    %v273 = vmul.f32 %v270, %v138
    %v274 = vadd.f32 %v266, %v271
    %v275 = vadd.f32 %v267, %v272
    %v276 = vadd.f32 %v268, %v273
    %s277 = sld [smem:[#allocation2 + $0x29]]
    %v278 = vstv %s277
    %v279 = vadd.f32 %v274, %v278
    %v280 = vadd.f32 %v275, %v278
    %v281 = vadd.f32 %v276, %v278
    %v282 = vxor.u32 %v279, 2147483648
    %v283 = vxor.u32 %v280, 2147483648
    %v284 = vxor.u32 %v281, 2147483648
    %v285 = vmul.f32 %v282, 1.442695
    %v286 = vpow.pop %v285
    %v287 = vmul.f32 %v283, 1.442695
    %v288 = vpow.pop %v287
    %v289 = vmul.f32 %v284, 1.442695
    %v290 = vpow.pop %v289
    %v291 = vadd.f32 %v286, 1.0
    %v292 = vadd.f32 %v288, 1.0
    %v293 = vadd.f32 %v290, 1.0
    %v294 = vrcp.pop %v291
    %v295 = vmul.f32 1.0, %v294
    %v296 = vrcp.pop %v292
    %v297 = vmul.f32 1.0, %v296
    %v298 = vrcp.pop %v293
    %v299 = vmul.f32 1.0, %v298
    %s300 = scalar_lea.vmem %s1, 24
    %v301 = vld [vmem:[%s300] sm:$0xff]
    %v302 = vld [vmem:[%s300 + $0x8] sm:$0xff]
    %v303 = vld [vmem:[%s300 + $0x10] sm:$0x3f]
    %305 = vset.pattern.permute.xlu0 0
    %306 = vperm.xlu0 %305, %v301
    %v307 = vpop.permute.xlu0 %306
    %310 = vset.pattern.permute.xlu0 0
    %311 = vperm.xlu0 %310, %v302
    %v312 = vpop.permute.xlu0 %311
    %315 = vset.pattern.permute.xlu0 0
    %316 = vperm.xlu0 %315, %v303
    %v317 = vpop.permute.xlu0 %316
    %v319 = vmul.f32 %v295, %v307
    %v320 = vmul.f32 %v297, %v312
    %v321 = vmul.f32 %v299, %v317
    %v322 = vadd.f32 %v319, %v320
    %v323 = vsel %vm191, %v321, 0.0
    %v324 = vadd.f32 %v322, %v323
    %v325 = vrot.slane %v324, 4
    %v326 = vadd.f32 %v324, %v325
    %v327 = vrot.slane %v326, 2
    %v328 = vadd.f32 %v326, %v327
    %v329 = vrot.slane %v328, 1
    %v330 = vadd.f32 %v328, %v329
    %s331 = sld [smem:[#allocation2 + $0x14]]
    %v332 = vstv %s331
    %v333 = vmul.f32 %v332, %v31
    %v334 = vmul.f32 %v332, %v32
    %v335 = vmul.f32 %v332, %v33
    %s336 = sld [smem:[#allocation2 + $0x15]]
    %v337 = vstv %s336
    %v338 = vmul.f32 %v337, %v40
    %v339 = vmul.f32 %v337, %v41
    %v340 = vmul.f32 %v337, %v42
    %v341 = vadd.f32 %v333, %v338
    %v342 = vadd.f32 %v334, %v339
    %v343 = vadd.f32 %v335, %v340
    %s344 = sld [smem:[#allocation2 + $0x16]]
    %v345 = vstv %s344
    %v346 = vmul.f32 %v345, %v52
    %v347 = vmul.f32 %v345, %v53
    %v348 = vmul.f32 %v345, %v54
    %v349 = vadd.f32 %v341, %v346
    %v350 = vadd.f32 %v342, %v347
    %v351 = vadd.f32 %v343, %v348
    %s352 = sld [smem:[#allocation2 + $0x17]]
    %v353 = vstv %s352
    %v354 = vmul.f32 %v353, %v64
    %v355 = vmul.f32 %v353, %v65
    %v356 = vmul.f32 %v353, %v66
    %v357 = vadd.f32 %v349, %v354
    %v358 = vadd.f32 %v350, %v355
    %v359 = vadd.f32 %v351, %v356
    %s360 = sld [smem:[#allocation2 + $0x18]]
    %v361 = vstv %s360
    %v362 = vmul.f32 %v361, %v76
    %v363 = vmul.f32 %v361, %v77
    %v364 = vmul.f32 %v361, %v78
    %v365 = vadd.f32 %v357, %v362
    %v366 = vadd.f32 %v358, %v363
    %v367 = vadd.f32 %v359, %v364
    %s368 = sld [smem:[#allocation2 + $0x19]]
    %v369 = vstv %s368
    %v370 = vmul.f32 %v369, %v88
    %v371 = vmul.f32 %v369, %v89
    %v372 = vmul.f32 %v369, %v90
    %v373 = vadd.f32 %v365, %v370
    %v374 = vadd.f32 %v366, %v371
    %v375 = vadd.f32 %v367, %v372
    %s376 = sld [smem:[#allocation2 + $0x1a]]
    %v377 = vstv %s376
    %v378 = vmul.f32 %v377, %v100
    %v379 = vmul.f32 %v377, %v101
    %v380 = vmul.f32 %v377, %v102
    %v381 = vadd.f32 %v373, %v378
    %v382 = vadd.f32 %v374, %v379
    %v383 = vadd.f32 %v375, %v380
    %s384 = sld [smem:[#allocation2 + $0x1b]]
    %v385 = vstv %s384
    %v386 = vmul.f32 %v385, %v112
    %v387 = vmul.f32 %v385, %v113
    %v388 = vmul.f32 %v385, %v114
    %v389 = vadd.f32 %v381, %v386
    %v390 = vadd.f32 %v382, %v387
    %v391 = vadd.f32 %v383, %v388
    %s392 = sld [smem:[#allocation2 + $0x1c]]
    %v393 = vstv %s392
    %v394 = vmul.f32 %v393, %v124
    %v395 = vmul.f32 %v393, %v125
    %v396 = vmul.f32 %v393, %v126
    %v397 = vadd.f32 %v389, %v394
    %v398 = vadd.f32 %v390, %v395
    %v399 = vadd.f32 %v391, %v396
    %s400 = sld [smem:[#allocation2 + $0x1d]]
    %v401 = vstv %s400
    %v402 = vmul.f32 %v401, %v136
    %v403 = vmul.f32 %v401, %v137
    %v404 = vmul.f32 %v401, %v138
    %v405 = vadd.f32 %v397, %v402
    %v406 = vadd.f32 %v398, %v403
    %v407 = vadd.f32 %v399, %v404
    %s408 = sld [smem:[#allocation2 + $0x2a]]
    %v409 = vstv %s408
    %v410 = vadd.f32 %v405, %v409
    %v411 = vadd.f32 %v406, %v409
    %v412 = vadd.f32 %v407, %v409
    %v413 = vxor.u32 %v410, 2147483648
    %v414 = vxor.u32 %v411, 2147483648
    %v415 = vxor.u32 %v412, 2147483648
    %v416 = vmul.f32 %v413, 1.442695
    %v417 = vpow.pop %v416
    %v418 = vmul.f32 %v414, 1.442695
    %v419 = vpow.pop %v418
    %v420 = vmul.f32 %v415, 1.442695
    %v421 = vpow.pop %v420
    %v422 = vadd.f32 %v417, 1.0
    %v423 = vadd.f32 %v419, 1.0
    %v424 = vadd.f32 %v421, 1.0
    %v425 = vrcp.pop %v422
    %v426 = vmul.f32 1.0, %v425
    %v427 = vrcp.pop %v423
    %v428 = vmul.f32 1.0, %v427
    %v429 = vrcp.pop %v424
    %v430 = vmul.f32 1.0, %v429
    %s431 = scalar_lea.vmem %s1, 48
    %v432 = vld [vmem:[%s431] sm:$0xff]
    %v433 = vld [vmem:[%s431 + $0x8] sm:$0xff]
    %v434 = vld [vmem:[%s431 + $0x10] sm:$0x3f]
    %436 = vset.pattern.permute.xlu0 0
    %437 = vperm.xlu0 %436, %v432
    %v438 = vpop.permute.xlu0 %437
    %441 = vset.pattern.permute.xlu0 0
    %442 = vperm.xlu0 %441, %v433
    %v443 = vpop.permute.xlu0 %442
    %446 = vset.pattern.permute.xlu0 0
    %447 = vperm.xlu0 %446, %v434
    %v448 = vpop.permute.xlu0 %447
    %v450 = vmul.f32 %v426, %v438
    %v451 = vmul.f32 %v428, %v443
    %v452 = vmul.f32 %v430, %v448
    %v453 = vadd.f32 %v450, %v451
    %v454 = vsel %vm191, %v452, 0.0
    %v455 = vadd.f32 %v453, %v454
    %v456 = vrot.slane %v455, 4
    %v457 = vadd.f32 %v455, %v456
    %v458 = vrot.slane %v457, 2
    %v459 = vadd.f32 %v457, %v458
    %v460 = vrot.slane %v459, 1
    %v461 = vadd.f32 %v459, %v460
    %s462 = sld [smem:[#allocation2 + $0x1e]]
    %v463 = vstv %s462
    %v464 = vmul.f32 %v463, %v31
    %v465 = vmul.f32 %v463, %v32
    %v466 = vmul.f32 %v463, %v33
    %s467 = sld [smem:[#allocation2 + $0x1f]]
    %v468 = vstv %s467
    %v469 = vmul.f32 %v468, %v40
    %v470 = vmul.f32 %v468, %v41
    %v471 = vmul.f32 %v468, %v42
    %v472 = vadd.f32 %v464, %v469
    %v473 = vadd.f32 %v465, %v470
    %v474 = vadd.f32 %v466, %v471
    %s475 = sld [smem:[#allocation2 + $0x20]]
    %v476 = vstv %s475
    %v477 = vmul.f32 %v476, %v52
    %v478 = vmul.f32 %v476, %v53
    %v479 = vmul.f32 %v476, %v54
    %v480 = vadd.f32 %v472, %v477
    %v481 = vadd.f32 %v473, %v478
    %v482 = vadd.f32 %v474, %v479
    %s483 = sld [smem:[#allocation2 + $0x21]]
    %v484 = vstv %s483
    %v485 = vmul.f32 %v484, %v64
    %v486 = vmul.f32 %v484, %v65
    %v487 = vmul.f32 %v484, %v66
    %v488 = vadd.f32 %v480, %v485
    %v489 = vadd.f32 %v481, %v486
    %v490 = vadd.f32 %v482, %v487
    %s491 = sld [smem:[#allocation2 + $0x22]]
    %v492 = vstv %s491
    %v493 = vmul.f32 %v492, %v76
    %v494 = vmul.f32 %v492, %v77
    %v495 = vmul.f32 %v492, %v78
    %v496 = vadd.f32 %v488, %v493
    %v497 = vadd.f32 %v489, %v494
    %v498 = vadd.f32 %v490, %v495
    %s499 = sld [smem:[#allocation2 + $0x23]]
    %v500 = vstv %s499
    %v501 = vmul.f32 %v500, %v88
    %v502 = vmul.f32 %v500, %v89
    %v503 = vmul.f32 %v500, %v90
    %v504 = vadd.f32 %v496, %v501
    %v505 = vadd.f32 %v497, %v502
    %v506 = vadd.f32 %v498, %v503
    %s507 = sld [smem:[#allocation2 + $0x24]]
    %v508 = vstv %s507
    %v509 = vmul.f32 %v508, %v100
    %v510 = vmul.f32 %v508, %v101
    %v511 = vmul.f32 %v508, %v102
    %v512 = vadd.f32 %v504, %v509
    %v513 = vadd.f32 %v505, %v510
    %v514 = vadd.f32 %v506, %v511
    %s515 = sld [smem:[#allocation2 + $0x25]]
    %v516 = vstv %s515
    %v517 = vmul.f32 %v516, %v112
    %v518 = vmul.f32 %v516, %v113
    %v519 = vmul.f32 %v516, %v114
    %v520 = vadd.f32 %v512, %v517
    %v521 = vadd.f32 %v513, %v518
    %v522 = vadd.f32 %v514, %v519
    %s523 = sld [smem:[#allocation2 + $0x26]]
    %v524 = vstv %s523
    %v525 = vmul.f32 %v524, %v124
    %v526 = vmul.f32 %v524, %v125
    %v527 = vmul.f32 %v524, %v126
    %v528 = vadd.f32 %v520, %v525
    %v529 = vadd.f32 %v521, %v526
    %v530 = vadd.f32 %v522, %v527
    %s531 = sld [smem:[#allocation2 + $0x27]]
    %v532 = vstv %s531
    %v533 = vmul.f32 %v532, %v136
    %v534 = vmul.f32 %v532, %v137
    %v535 = vmul.f32 %v532, %v138
    %v536 = vadd.f32 %v528, %v533
    %v537 = vadd.f32 %v529, %v534
    %v538 = vadd.f32 %v530, %v535
    %s539 = sld [smem:[#allocation2 + $0x2b]]
    %v540 = vstv %s539
    %v541 = vadd.f32 %v536, %v540
    %v542 = vadd.f32 %v537, %v540
    %v543 = vadd.f32 %v538, %v540
    %v544 = vxor.u32 %v541, 2147483648
    %v545 = vxor.u32 %v542, 2147483648
    %v546 = vxor.u32 %v543, 2147483648
    %v547 = vmul.f32 %v544, 1.442695
    %v548 = vpow.pop %v547
    %v549 = vmul.f32 %v545, 1.442695
    %v550 = vpow.pop %v549
    %v551 = vmul.f32 %v546, 1.442695
    %v552 = vpow.pop %v551
    %v553 = vadd.f32 %v548, 1.0
    %v554 = vadd.f32 %v550, 1.0
    %v555 = vadd.f32 %v552, 1.0
    %v556 = vrcp.pop %v553
    %v557 = vmul.f32 1.0, %v556
    %v558 = vrcp.pop %v554
    %v559 = vmul.f32 1.0, %v558
    %v560 = vrcp.pop %v555
    %v561 = vmul.f32 1.0, %v560
    %s562 = scalar_lea.vmem %s1, 72
    %v563 = vld [vmem:[%s562] sm:$0xff]
    %v564 = vld [vmem:[%s562 + $0x8] sm:$0xff]
    %v565 = vld [vmem:[%s562 + $0x10] sm:$0x3f]
    %567 = vset.pattern.permute.xlu0 0
    %568 = vperm.xlu0 %567, %v563
    %v569 = vpop.permute.xlu0 %568
    %572 = vset.pattern.permute.xlu0 0
    %573 = vperm.xlu0 %572, %v564
    %v574 = vpop.permute.xlu0 %573
    %577 = vset.pattern.permute.xlu0 0
    %578 = vperm.xlu0 %577, %v565
    %v579 = vpop.permute.xlu0 %578
    %v581 = vmul.f32 %v557, %v569
    %v582 = vmul.f32 %v559, %v574
    %v583 = vmul.f32 %v561, %v579
    %v584 = vadd.f32 %v581, %v582
    %v585 = vsel %vm191, %v583, 0.0
    %v586 = vadd.f32 %v584, %v585
    %v587 = vrot.slane %v586, 4
    %v588 = vadd.f32 %v586, %v587
    %v589 = vrot.slane %v588, 2
    %v590 = vadd.f32 %v588, %v589
    %v591 = vrot.slane %v590, 1
    %v592 = vadd.f32 %v590, %v591
    %s593 = sld [smem:[#allocation2 + $0x2c]]
    %v594 = vstv %s593
    %v595 = vmul.f32 %v594, %v199
    %s596 = sld [smem:[#allocation2 + $0x2d]]
    %v597 = vstv %s596
    %v598 = vmul.f32 %v597, %v330
    %v599 = vadd.f32 %v595, %v598
    %s600 = sld [smem:[#allocation2 + $0x2e]]
    %v601 = vstv %s600
    %v602 = vmul.f32 %v601, %v461
    %v603 = vadd.f32 %v599, %v602
    %s604 = sld [smem:[#allocation2 + $0x2f]]
    %v605 = vstv %s604
    %v606 = vmul.f32 %v605, %v592
    %v607 = vadd.f32 %v603, %v606
    %s608 = sld [smem:[#allocation2 + $0x4c]]
    %v609 = vstv %s608
    %v610 = vadd.f32 %v607, %v609
    %v611 = vxor.u32 %v610, 2147483648
    %v612 = vmul.f32 %v611, 1.442695
    %v613 = vpow.pop %v612
    %v614 = vadd.f32 %v613, 1.0
    %v615 = vrcp.pop %v614
    %v616 = vmul.f32 1.0, %v615
    %s617 = sld [smem:[#allocation2 + $0x30]]
    %v618 = vstv %s617
    %v619 = vmul.f32 %v618, %v199
    %s620 = sld [smem:[#allocation2 + $0x31]]
    %v621 = vstv %s620
    %v622 = vmul.f32 %v621, %v330
    %v623 = vadd.f32 %v619, %v622
    %s624 = sld [smem:[#allocation2 + $0x32]]
    %v625 = vstv %s624
    %v626 = vmul.f32 %v625, %v461
    %v627 = vadd.f32 %v623, %v626
    %s628 = sld [smem:[#allocation2 + $0x33]]
    %v629 = vstv %s628
    %v630 = vmul.f32 %v629, %v592
    %v631 = vadd.f32 %v627, %v630
    %s632 = sld [smem:[#allocation2 + $0x4d]]
    %v633 = vstv %s632
    %v634 = vadd.f32 %v631, %v633
    %v635 = vxor.u32 %v634, 2147483648
    %v636 = vmul.f32 %v635, 1.442695
    %v637 = vpow.pop %v636
    %v638 = vadd.f32 %v637, 1.0
    %v639 = vrcp.pop %v638
    %v640 = vmul.f32 1.0, %v639
    %s641 = sld [smem:[#allocation2 + $0x34]]
    %v642 = vstv %s641
    %v643 = vmul.f32 %v642, %v199
    %s644 = sld [smem:[#allocation2 + $0x35]]
    %v645 = vstv %s644
    %v646 = vmul.f32 %v645, %v330
    %v647 = vadd.f32 %v643, %v646
    %s648 = sld [smem:[#allocation2 + $0x36]]
    %v649 = vstv %s648
    %v650 = vmul.f32 %v649, %v461
    %v651 = vadd.f32 %v647, %v650
    %s652 = sld [smem:[#allocation2 + $0x37]]
    %v653 = vstv %s652
    %v654 = vmul.f32 %v653, %v592
    %v655 = vadd.f32 %v651, %v654
    %s656 = sld [smem:[#allocation2 + $0x4e]]
    %v657 = vstv %s656
    %v658 = vadd.f32 %v655, %v657
    %v659 = vxor.u32 %v658, 2147483648
    %v660 = vmul.f32 %v659, 1.442695
    %v661 = vpow.pop %v660
    %v662 = vadd.f32 %v661, 1.0
    %v663 = vrcp.pop %v662
    %v664 = vmul.f32 1.0, %v663
    %s665 = sld [smem:[#allocation2 + $0x38]]
    %v666 = vstv %s665
    %v667 = vmul.f32 %v666, %v199
    %s668 = sld [smem:[#allocation2 + $0x39]]
    %v669 = vstv %s668
    %v670 = vmul.f32 %v669, %v330
    %v671 = vadd.f32 %v667, %v670
    %s672 = sld [smem:[#allocation2 + $0x3a]]
    %v673 = vstv %s672
    %v674 = vmul.f32 %v673, %v461
    %v675 = vadd.f32 %v671, %v674
    %s676 = sld [smem:[#allocation2 + $0x3b]]
    %v677 = vstv %s676
    %v678 = vmul.f32 %v677, %v592
    %v679 = vadd.f32 %v675, %v678
    %s680 = sld [smem:[#allocation2 + $0x4f]]
    %v681 = vstv %s680
    %v682 = vadd.f32 %v679, %v681
    %v683 = vxor.u32 %v682, 2147483648
    %v684 = vmul.f32 %v683, 1.442695
    %v685 = vpow.pop %v684
    %v686 = vadd.f32 %v685, 1.0
    %v687 = vrcp.pop %v686
    %v688 = vmul.f32 1.0, %v687
    %s689 = sld [smem:[#allocation2 + $0x3c]]
    %v690 = vstv %s689
    %v691 = vmul.f32 %v690, %v199
    %s692 = sld [smem:[#allocation2 + $0x3d]]
    %v693 = vstv %s692
    %v694 = vmul.f32 %v693, %v330
    %v695 = vadd.f32 %v691, %v694
    %s696 = sld [smem:[#allocation2 + $0x3e]]
    %v697 = vstv %s696
    %v698 = vmul.f32 %v697, %v461
    %v699 = vadd.f32 %v695, %v698
    %s700 = sld [smem:[#allocation2 + $0x3f]]
    %v701 = vstv %s700
    %v702 = vmul.f32 %v701, %v592
    %v703 = vadd.f32 %v699, %v702
    %s704 = sld [smem:[#allocation2 + $0x50]]
    %v705 = vstv %s704
    %v706 = vadd.f32 %v703, %v705
    %v707 = vxor.u32 %v706, 2147483648
    %v708 = vmul.f32 %v707, 1.442695
    %v709 = vpow.pop %v708
    %v710 = vadd.f32 %v709, 1.0
    %v711 = vrcp.pop %v710
    %v712 = vmul.f32 1.0, %v711
    %s713 = sld [smem:[#allocation2 + $0x40]]
    %v714 = vstv %s713
    %v715 = vmul.f32 %v714, %v199
    %s716 = sld [smem:[#allocation2 + $0x41]]
    %v717 = vstv %s716
    %v718 = vmul.f32 %v717, %v330
    %v719 = vadd.f32 %v715, %v718
    %s720 = sld [smem:[#allocation2 + $0x42]]
    %v721 = vstv %s720
    %v722 = vmul.f32 %v721, %v461
    %v723 = vadd.f32 %v719, %v722
    %s724 = sld [smem:[#allocation2 + $0x43]]
    %v725 = vstv %s724
    %v726 = vmul.f32 %v725, %v592
    %v727 = vadd.f32 %v723, %v726
    %s728 = sld [smem:[#allocation2 + $0x51]]
    %v729 = vstv %s728
    %v730 = vadd.f32 %v727, %v729
    %v731 = vxor.u32 %v730, 2147483648
    %v732 = vmul.f32 %v731, 1.442695
    %v733 = vpow.pop %v732
    %v734 = vadd.f32 %v733, 1.0
    %v735 = vrcp.pop %v734
    %v736 = vmul.f32 1.0, %v735
    %s737 = sld [smem:[#allocation2 + $0x44]]
    %v738 = vstv %s737
    %v739 = vmul.f32 %v738, %v199
    %s740 = sld [smem:[#allocation2 + $0x45]]
    %v741 = vstv %s740
    %v742 = vmul.f32 %v741, %v330
    %v743 = vadd.f32 %v739, %v742
    %s744 = sld [smem:[#allocation2 + $0x46]]
    %v745 = vstv %s744
    %v746 = vmul.f32 %v745, %v461
    %v747 = vadd.f32 %v743, %v746
    %s748 = sld [smem:[#allocation2 + $0x47]]
    %v749 = vstv %s748
    %v750 = vmul.f32 %v749, %v592
    %v751 = vadd.f32 %v747, %v750
    %s752 = sld [smem:[#allocation2 + $0x52]]
    %v753 = vstv %s752
    %v754 = vadd.f32 %v751, %v753
    %v755 = vxor.u32 %v754, 2147483648
    %v756 = vmul.f32 %v755, 1.442695
    %v757 = vpow.pop %v756
    %v758 = vadd.f32 %v757, 1.0
    %v759 = vrcp.pop %v758
    %v760 = vmul.f32 1.0, %v759
    %s761 = sld [smem:[#allocation2 + $0x48]]
    %v762 = vstv %s761
    %v763 = vmul.f32 %v762, %v199
    %s764 = sld [smem:[#allocation2 + $0x49]]
    %v765 = vstv %s764
    %v766 = vmul.f32 %v765, %v330
    %v767 = vadd.f32 %v763, %v766
    %s768 = sld [smem:[#allocation2 + $0x4a]]
    %v769 = vstv %s768
    %v770 = vmul.f32 %v769, %v461
    %v771 = vadd.f32 %v767, %v770
    %s772 = sld [smem:[#allocation2 + $0x4b]]
    %v773 = vstv %s772
    %v774 = vmul.f32 %v773, %v592
    %v775 = vadd.f32 %v771, %v774
    %s776 = sld [smem:[#allocation2 + $0x53]]
    %v777 = vstv %s776
    %v778 = vadd.f32 %v775, %v777
    %v779 = vxor.u32 %v778, 2147483648
    %v780 = vmul.f32 %v779, 1.442695
    %v781 = vpow.pop %v780
    %v782 = vadd.f32 %v781, 1.0
    %v783 = vrcp.pop %v782
    %v784 = vmul.f32 1.0, %v783
    %v785 = vld [vmem:[%s2] sm:$0xff]
    %v786 = vld [vmem:[%s2 + $0x8] sm:$0xff]
    %v787 = vld [vmem:[%s2 + $0x10] sm:$0xff]
    %v788 = vld [vmem:[%s2 + $0x18] sm:$0xff]
    %v789 = vld [vmem:[%s2 + $0x20] sm:$0xff]
    %v790 = vld [vmem:[%s2 + $0x28] sm:$0xff]
    %v791 = vld [vmem:[%s2 + $0x30] sm:$0x3]
    %793 = vset.pattern.permute.xlu0 0
    %794 = vperm.xlu0 %793, %v785
    %v795 = vpop.permute.xlu0 %794
    %798 = vset.pattern.permute.xlu0 0
    %799 = vperm.xlu0 %798, %v786
    %v800 = vpop.permute.xlu0 %799
    %803 = vset.pattern.permute.xlu0 0
    %804 = vperm.xlu0 %803, %v787
    %v805 = vpop.permute.xlu0 %804
    %808 = vset.pattern.permute.xlu0 0
    %809 = vperm.xlu0 %808, %v788
    %v810 = vpop.permute.xlu0 %809
    %813 = vset.pattern.permute.xlu0 0
    %814 = vperm.xlu0 %813, %v789
    %v815 = vpop.permute.xlu0 %814
    %818 = vset.pattern.permute.xlu0 0
    %819 = vperm.xlu0 %818, %v790
    %v820 = vpop.permute.xlu0 %819
    %823 = vset.pattern.permute.xlu0 0
    %824 = vperm.xlu0 %823, %v791
    %v825 = vpop.permute.xlu0 %824
    %v827 = vmul.f32 %v795, %v616
    %v828 = vmul.f32 %v800, %v616
    %v829 = vmul.f32 %v805, %v616
    %v830 = vmul.f32 %v810, %v616
    %v831 = vmul.f32 %v815, %v616
    %v832 = vmul.f32 %v820, %v616
    %v833 = vmul.f32 %v825, %v616
    %834 = vset.pattern.permute.xlu0 8
    %835 = vperm.xlu0 %834, %v785
    %v836 = vpop.permute.xlu0 %835
    %838 = vset.pattern.permute.xlu0 8
    %839 = vperm.xlu0 %838, %v786
    %v840 = vpop.permute.xlu0 %839
    %842 = vset.pattern.permute.xlu0 8
    %843 = vperm.xlu0 %842, %v787
    %v844 = vpop.permute.xlu0 %843
    %846 = vset.pattern.permute.xlu0 8
    %847 = vperm.xlu0 %846, %v788
    %v848 = vpop.permute.xlu0 %847
    %850 = vset.pattern.permute.xlu0 8
    %851 = vperm.xlu0 %850, %v789
    %v852 = vpop.permute.xlu0 %851
    %854 = vset.pattern.permute.xlu0 8
    %855 = vperm.xlu0 %854, %v790
    %v856 = vpop.permute.xlu0 %855
    %858 = vset.pattern.permute.xlu0 8
    %859 = vperm.xlu0 %858, %v791
    %v860 = vpop.permute.xlu0 %859
    %v862 = vadd.f32 %v836, %v827
    %v863 = vadd.f32 %v840, %v828
    %v864 = vadd.f32 %v844, %v829
    %v865 = vadd.f32 %v848, %v830
    %v866 = vadd.f32 %v852, %v831
    %v867 = vadd.f32 %v856, %v832
    %v868 = vadd.f32 %v860, %v833
    %869 = vset.pattern.permute.xlu0 1
    %870 = vperm.xlu0 %869, %v785
    %v871 = vpop.permute.xlu0 %870
    %873 = vset.pattern.permute.xlu0 1
    %874 = vperm.xlu0 %873, %v786
    %v875 = vpop.permute.xlu0 %874
    %877 = vset.pattern.permute.xlu0 1
    %878 = vperm.xlu0 %877, %v787
    %v879 = vpop.permute.xlu0 %878
    %881 = vset.pattern.permute.xlu0 1
    %882 = vperm.xlu0 %881, %v788
    %v883 = vpop.permute.xlu0 %882
    %885 = vset.pattern.permute.xlu0 1
    %886 = vperm.xlu0 %885, %v789
    %v887 = vpop.permute.xlu0 %886
    %889 = vset.pattern.permute.xlu0 1
    %890 = vperm.xlu0 %889, %v790
    %v891 = vpop.permute.xlu0 %890
    %893 = vset.pattern.permute.xlu0 1
    %894 = vperm.xlu0 %893, %v791
    %v895 = vpop.permute.xlu0 %894
    %v897 = vmul.f32 %v871, %v640
    %v898 = vmul.f32 %v875, %v640
    %v899 = vmul.f32 %v879, %v640
    %v900 = vmul.f32 %v883, %v640
    %v901 = vmul.f32 %v887, %v640
    %v902 = vmul.f32 %v891, %v640
    %v903 = vmul.f32 %v895, %v640
    %v904 = vadd.f32 %v862, %v897
    %v905 = vadd.f32 %v863, %v898
    %v906 = vadd.f32 %v864, %v899
    %v907 = vadd.f32 %v865, %v900
    %v908 = vadd.f32 %v866, %v901
    %v909 = vadd.f32 %v867, %v902
    %v910 = vadd.f32 %v868, %v903
    %911 = vset.pattern.permute.xlu0 2
    %912 = vperm.xlu0 %911, %v785
    %v913 = vpop.permute.xlu0 %912
    %915 = vset.pattern.permute.xlu0 2
    %916 = vperm.xlu0 %915, %v786
    %v917 = vpop.permute.xlu0 %916
    %919 = vset.pattern.permute.xlu0 2
    %920 = vperm.xlu0 %919, %v787
    %v921 = vpop.permute.xlu0 %920
    %923 = vset.pattern.permute.xlu0 2
    %924 = vperm.xlu0 %923, %v788
    %v925 = vpop.permute.xlu0 %924
    %927 = vset.pattern.permute.xlu0 2
    %928 = vperm.xlu0 %927, %v789
    %v929 = vpop.permute.xlu0 %928
    %931 = vset.pattern.permute.xlu0 2
    %932 = vperm.xlu0 %931, %v790
    %v933 = vpop.permute.xlu0 %932
    %935 = vset.pattern.permute.xlu0 2
    %936 = vperm.xlu0 %935, %v791
    %v937 = vpop.permute.xlu0 %936
    %v939 = vmul.f32 %v913, %v664
    %v940 = vmul.f32 %v917, %v664
    %v941 = vmul.f32 %v921, %v664
    %v942 = vmul.f32 %v925, %v664
    %v943 = vmul.f32 %v929, %v664
    %v944 = vmul.f32 %v933, %v664
    %v945 = vmul.f32 %v937, %v664
    %v946 = vadd.f32 %v904, %v939
    %v947 = vadd.f32 %v905, %v940
    %v948 = vadd.f32 %v906, %v941
    %v949 = vadd.f32 %v907, %v942
    %v950 = vadd.f32 %v908, %v943
    %v951 = vadd.f32 %v909, %v944
    %v952 = vadd.f32 %v910, %v945
    %953 = vset.pattern.permute.xlu0 3
    %954 = vperm.xlu0 %953, %v785
    %v955 = vpop.permute.xlu0 %954
    %957 = vset.pattern.permute.xlu0 3
    %958 = vperm.xlu0 %957, %v786
    %v959 = vpop.permute.xlu0 %958
    %961 = vset.pattern.permute.xlu0 3
    %962 = vperm.xlu0 %961, %v787
    %v963 = vpop.permute.xlu0 %962
    %965 = vset.pattern.permute.xlu0 3
    %966 = vperm.xlu0 %965, %v788
    %v967 = vpop.permute.xlu0 %966
    %969 = vset.pattern.permute.xlu0 3
    %970 = vperm.xlu0 %969, %v789
    %v971 = vpop.permute.xlu0 %970
    %973 = vset.pattern.permute.xlu0 3
    %974 = vperm.xlu0 %973, %v790
    %v975 = vpop.permute.xlu0 %974
    %977 = vset.pattern.permute.xlu0 3
    %978 = vperm.xlu0 %977, %v791
    %v979 = vpop.permute.xlu0 %978
    %v981 = vmul.f32 %v955, %v688
    %v982 = vmul.f32 %v959, %v688
    %v983 = vmul.f32 %v963, %v688
    %v984 = vmul.f32 %v967, %v688
    %v985 = vmul.f32 %v971, %v688
    %v986 = vmul.f32 %v975, %v688
    %v987 = vmul.f32 %v979, %v688
    %v988 = vadd.f32 %v946, %v981
    %v989 = vadd.f32 %v947, %v982
    %v990 = vadd.f32 %v948, %v983
    %v991 = vadd.f32 %v949, %v984
    %v992 = vadd.f32 %v950, %v985
    %v993 = vadd.f32 %v951, %v986
    %v994 = vadd.f32 %v952, %v987
    %995 = vset.pattern.permute.xlu0 4
    %996 = vperm.xlu0 %995, %v785
    %v997 = vpop.permute.xlu0 %996
    %999 = vset.pattern.permute.xlu0 4
    %1000 = vperm.xlu0 %999, %v786
    %v1001 = vpop.permute.xlu0 %1000
    %1003 = vset.pattern.permute.xlu0 4
    %1004 = vperm.xlu0 %1003, %v787
    %v1005 = vpop.permute.xlu0 %1004
    %1007 = vset.pattern.permute.xlu0 4
    %1008 = vperm.xlu0 %1007, %v788
    %v1009 = vpop.permute.xlu0 %1008
    %1011 = vset.pattern.permute.xlu0 4
    %1012 = vperm.xlu0 %1011, %v789
    %v1013 = vpop.permute.xlu0 %1012
    %1015 = vset.pattern.permute.xlu0 4
    %1016 = vperm.xlu0 %1015, %v790
    %v1017 = vpop.permute.xlu0 %1016
    %1019 = vset.pattern.permute.xlu0 4
    %1020 = vperm.xlu0 %1019, %v791
    %v1021 = vpop.permute.xlu0 %1020
    %v1023 = vmul.f32 %v997, %v712
    %v1024 = vmul.f32 %v1001, %v712
    %v1025 = vmul.f32 %v1005, %v712
    %v1026 = vmul.f32 %v1009, %v712
    %v1027 = vmul.f32 %v1013, %v712
    %v1028 = vmul.f32 %v1017, %v712
    %v1029 = vmul.f32 %v1021, %v712
    %v1030 = vadd.f32 %v988, %v1023
    %v1031 = vadd.f32 %v989, %v1024
    %v1032 = vadd.f32 %v990, %v1025
    %v1033 = vadd.f32 %v991, %v1026
    %v1034 = vadd.f32 %v992, %v1027
    %v1035 = vadd.f32 %v993, %v1028
    %v1036 = vadd.f32 %v994, %v1029
    %1037 = vset.pattern.permute.xlu0 5
    %1038 = vperm.xlu0 %1037, %v785
    %v1039 = vpop.permute.xlu0 %1038
    %1041 = vset.pattern.permute.xlu0 5
    %1042 = vperm.xlu0 %1041, %v786
    %v1043 = vpop.permute.xlu0 %1042
    %1045 = vset.pattern.permute.xlu0 5
    %1046 = vperm.xlu0 %1045, %v787
    %v1047 = vpop.permute.xlu0 %1046
    %1049 = vset.pattern.permute.xlu0 5
    %1050 = vperm.xlu0 %1049, %v788
    %v1051 = vpop.permute.xlu0 %1050
    %1053 = vset.pattern.permute.xlu0 5
    %1054 = vperm.xlu0 %1053, %v789
    %v1055 = vpop.permute.xlu0 %1054
    %1057 = vset.pattern.permute.xlu0 5
    %1058 = vperm.xlu0 %1057, %v790
    %v1059 = vpop.permute.xlu0 %1058
    %1061 = vset.pattern.permute.xlu0 5
    %1062 = vperm.xlu0 %1061, %v791
    %v1063 = vpop.permute.xlu0 %1062
    %v1065 = vmul.f32 %v1039, %v736
    %v1066 = vmul.f32 %v1043, %v736
    %v1067 = vmul.f32 %v1047, %v736
    %v1068 = vmul.f32 %v1051, %v736
    %v1069 = vmul.f32 %v1055, %v736
    %v1070 = vmul.f32 %v1059, %v736
    %v1071 = vmul.f32 %v1063, %v736
    %v1072 = vadd.f32 %v1030, %v1065
    %v1073 = vadd.f32 %v1031, %v1066
    %v1074 = vadd.f32 %v1032, %v1067
    %v1075 = vadd.f32 %v1033, %v1068
    %v1076 = vadd.f32 %v1034, %v1069
    %v1077 = vadd.f32 %v1035, %v1070
    %v1078 = vadd.f32 %v1036, %v1071
    %1079 = vset.pattern.permute.xlu0 6
    %1080 = vperm.xlu0 %1079, %v785
    %v1081 = vpop.permute.xlu0 %1080
    %1083 = vset.pattern.permute.xlu0 6
    %1084 = vperm.xlu0 %1083, %v786
    %v1085 = vpop.permute.xlu0 %1084
    %1087 = vset.pattern.permute.xlu0 6
    %1088 = vperm.xlu0 %1087, %v787
    %v1089 = vpop.permute.xlu0 %1088
    %1091 = vset.pattern.permute.xlu0 6
    %1092 = vperm.xlu0 %1091, %v788
    %v1093 = vpop.permute.xlu0 %1092
    %1095 = vset.pattern.permute.xlu0 6
    %1096 = vperm.xlu0 %1095, %v789
    %v1097 = vpop.permute.xlu0 %1096
    %1099 = vset.pattern.permute.xlu0 6
    %1100 = vperm.xlu0 %1099, %v790
    %v1101 = vpop.permute.xlu0 %1100
    %1103 = vset.pattern.permute.xlu0 6
    %1104 = vperm.xlu0 %1103, %v791
    %v1105 = vpop.permute.xlu0 %1104
    %v1107 = vmul.f32 %v1081, %v760
    %v1108 = vmul.f32 %v1085, %v760
    %v1109 = vmul.f32 %v1089, %v760
    %v1110 = vmul.f32 %v1093, %v760
    %v1111 = vmul.f32 %v1097, %v760
    %v1112 = vmul.f32 %v1101, %v760
    %v1113 = vmul.f32 %v1105, %v760
    %v1114 = vadd.f32 %v1072, %v1107
    %v1115 = vadd.f32 %v1073, %v1108
    %v1116 = vadd.f32 %v1074, %v1109
    %v1117 = vadd.f32 %v1075, %v1110
    %v1118 = vadd.f32 %v1076, %v1111
    %v1119 = vadd.f32 %v1077, %v1112
    %v1120 = vadd.f32 %v1078, %v1113
    %1121 = vset.pattern.permute.xlu0 7
    %1122 = vperm.xlu0 %1121, %v785
    %v1123 = vpop.permute.xlu0 %1122
    %1125 = vset.pattern.permute.xlu0 7
    %1126 = vperm.xlu0 %1125, %v786
    %v1127 = vpop.permute.xlu0 %1126
    %1129 = vset.pattern.permute.xlu0 7
    %1130 = vperm.xlu0 %1129, %v787
    %v1131 = vpop.permute.xlu0 %1130
    %1133 = vset.pattern.permute.xlu0 7
    %1134 = vperm.xlu0 %1133, %v788
    %v1135 = vpop.permute.xlu0 %1134
    %1137 = vset.pattern.permute.xlu0 7
    %1138 = vperm.xlu0 %1137, %v789
    %v1139 = vpop.permute.xlu0 %1138
    %1141 = vset.pattern.permute.xlu0 7
    %1142 = vperm.xlu0 %1141, %v790
    %v1143 = vpop.permute.xlu0 %1142
    %1145 = vset.pattern.permute.xlu0 7
    %1146 = vperm.xlu0 %1145, %v791
    %v1147 = vpop.permute.xlu0 %1146
    %v1149 = vmul.f32 %v1123, %v784
    %v1150 = vmul.f32 %v1127, %v784
    %v1151 = vmul.f32 %v1131, %v784
    %v1152 = vmul.f32 %v1135, %v784
    %v1153 = vmul.f32 %v1139, %v784
    %v1154 = vmul.f32 %v1143, %v784
    %v1155 = vmul.f32 %v1147, %v784
    %v1156 = vadd.f32 %v1114, %v1149
    %v1157 = vadd.f32 %v1115, %v1150
    %v1158 = vadd.f32 %v1116, %v1151
    %v1159 = vadd.f32 %v1117, %v1152
    %v1160 = vadd.f32 %v1118, %v1153
    %v1161 = vadd.f32 %v1119, %v1154
    %v1162 = vadd.f32 %v1120, %v1155
    %1163 = vst [vmem:[%s4] sm:$0xff] %v1156
    %1164 = vst [vmem:[%s4 + $0x8] sm:$0xff] %v1157
    %1165 = vst [vmem:[%s4 + $0x10] sm:$0xff] %v1158
    %1166 = vst [vmem:[%s4 + $0x18] sm:$0xff] %v1159
    %1167 = vst [vmem:[%s4 + $0x20] sm:$0xff] %v1160
    %1168 = vst [vmem:[%s4 + $0x28] sm:$0xff] %v1161
    %1169 = vst [vmem:[%s4 + $0x30] sm:$0x3] %v1162
    // Predicated region
    $region22: #{fnirsnet_forward.1} parent=1 // pred_check
      _
    $region23: #{fnirsnet_forward.1} parent=1 // pred_check_branch
      %1171 = sbr.rel (0) target = $region25
    $region24: #{fnirsnet_forward.1} parent=1 // pred_region
      _
    $region25: #{fnirsnet_forward.1} parent=1 // pred_fallthru
      _
    // Predicated region
    $region26: #{fnirsnet_forward.1} parent=1 // pred_check
      _
    $region27: #{fnirsnet_forward.1} parent=1 // pred_check_branch
      %1173 = sbr.rel (0) target = $region29
    $region28: #{fnirsnet_forward.1} parent=1 // pred_region
      _
    $region29: #{fnirsnet_forward.1} parent=1 // pred_fallthru
      _
    %1174 = vsyncpa [#allocation3], 1

</llo_original>
